<compile_context>
chip_gen: v7x
topology: tpu7x:2x2x1
jax: 0.10.0
libtpu: 0.0.40
codegen_flags: <defaults>
</compile_context>

<pallas_src>
import functools

import numpy as np

import jax
import jax.numpy as jnp
from jax import lax
from jax.experimental import pallas as pl
from jax.experimental.pallas import tpu as pltpu


def _vmem_budget_bytes():
    """Scoped VMEM budget: half of physical, capped at 64 MiB.

    v5e/v6e (128 MiB physical) -> 64 MiB, v7x (64 MiB physical) -> 32 MiB.
    Falls back to a conservative 32 MiB if the hardware query is unavailable.
    """
    try:
        phys = int(pltpu.get_tpu_info().vmem_capacity_bytes)
        return min(phys // 2, 64 * 1024 * 1024)
    except Exception:
        return 32 * 1024 * 1024


def _largest_divisor(n, cap, step=1):
    """Largest multiple of `step` that divides n and is <= cap (None if none)."""
    best = None
    d = step
    limit = min(n, cap)
    while d <= limit:
        if n % d == 0:
            best = d
        d += step
    return best


def _round_up(n, m):
    return ((n + m - 1) // m) * m


# ---------------------------------------------------------------------------
# Shared helper: pooled maps -> 7x7 conv -> eval-BN affine -> sigmoid
# (everything stays lane-dense, shape (1, HW))
# ---------------------------------------------------------------------------
def _gate_from_pool(mx, mean, colmask_ref, pad_ref, w_ref, bn_ref, *, H, W, K):
    """mx, mean: (1, HW) f32 channel-max / channel-mean maps (row-major HW).

    colmask_ref: (K, HW) VMEM f32; colmask[dj, n] = 1 iff column (n % W)+dj-K//2
                 stays inside [0, W) (removes taps that wrap into the next row).
    pad_ref:     (2, HW + 2*P) VMEM f32 scratch, P = (K//2)*(W+1); zero borders
                 emulate the conv's zero padding above/below the image.
    Returns the sigmoid gate, shape (1, HW) f32.
    """
    HW = H * W
    half = K // 2
    P = half * (W + 1)

    # Zero only the halo borders; the interior is fully overwritten below.
    # (Re-zeroed every call: scratch is per-core and uninitialized, so a
    #  program_id == 0 guard would be unsafe under megacore grid sharding.)
    pad_ref[:, 0:P] = jnp.zeros((2, P), jnp.float32)
    pad_ref[:, P + HW:P + HW + P] = jnp.zeros((2, P), jnp.float32)
    pad_ref[0:1, P:P + HW] = mx
    pad_ref[1:2, P:P + HW] = mean

    # out[n] = sum_{c,di,dj} w[c,di,dj] * padded[c, n + di*W + dj], with the
    # per-dj column mask removing cross-row wraparound taps.  Pure VPU work.
    acc = jnp.zeros((1, HW), jnp.float32)
    for dj in range(K):
        acc_j = jnp.zeros((1, HW), jnp.float32)
        for c in range(2):
            for di in range(K):
                wij = w_ref[c * K * K + di * K + dj]
                off = di * W + dj
                acc_j = acc_j + wij * pad_ref[c:c + 1, off:off + HW]
        acc = acc + colmask_ref[dj:dj + 1, :] * acc_j

    y = acc * bn_ref[0] + bn_ref[1]          # folded eval-mode BatchNorm
    return jax.nn.sigmoid(y)


# ---------------------------------------------------------------------------
# Fused kernel: pool over C, conv, BN, sigmoid, multiply — one pass over x
# ---------------------------------------------------------------------------
def _fused_kernel(colmask_ref, x_ref, w_ref, bn_ref, o_ref, pad_ref,
                  *, C, H, W, K):
    # colmask_ref: (K, HW) VMEM   x_ref/o_ref: (1, C, HW) VMEM (lane-dense)
    # w_ref: (2*K*K,) SMEM        bn_ref: (2,) SMEM
    xf = x_ref[0].astype(jnp.float32)                       # (C, HW)
    mx = jnp.max(xf, axis=0, keepdims=True)                 # (1, HW)
    mean = jnp.sum(xf, axis=0, keepdims=True) * (1.0 / C)   # (1, HW)
    gate = _gate_from_pool(mx, mean, colmask_ref, pad_ref, w_ref, bn_ref,
                           H=H, W=W, K=K)
    o_ref[0] = (x_ref[0] * gate).astype(o_ref.dtype)        # broadcast over C


# ---------------------------------------------------------------------------
# Fallback pass 1: lane-dense channel pooling -> gate map [N, 1, HW]
# ---------------------------------------------------------------------------
def _pool_gate_kernel(colmask_ref, x_ref, w_ref, bn_ref, gate_ref,
                      mx_ref, sm_ref, pad_ref, *, C, H, W, K):
    c_idx = pl.program_id(1)
    xf = x_ref[0].astype(jnp.float32)                       # (TC, HW)
    tile_max = jnp.max(xf, axis=0, keepdims=True)           # (1, HW)
    tile_sum = jnp.sum(xf, axis=0, keepdims=True)

    @pl.when(c_idx == 0)
    def _():
        mx_ref[...] = tile_max
        sm_ref[...] = tile_sum

    @pl.when(c_idx > 0)
    def _():
        mx_ref[...] = jnp.maximum(mx_ref[...], tile_max)
        sm_ref[...] = sm_ref[...] + tile_sum

    @pl.when(c_idx == pl.num_programs(1) - 1)
    def _():
        gate = _gate_from_pool(mx_ref[...], sm_ref[...] * (1.0 / C),
                               colmask_ref, pad_ref, w_ref, bn_ref,
                               H=H, W=W, K=K)
        gate_ref[0] = gate


# ---------------------------------------------------------------------------
# Fallback pass 2: out = x * gate, large lane-dense streaming tiles
# ---------------------------------------------------------------------------
def _apply_gate_kernel(x_ref, g_ref, o_ref):
    # x_ref: (1, TC, THW)   g_ref: (1, 1, THW)   o_ref: (1, TC, THW)
    o_ref[...] = (x_ref[...] * g_ref[...]).astype(o_ref.dtype)


def spatial_gate(x, conv_w, bn_gamma, bn_beta, bn_mean, bn_var, eps=1e-5, *,
                 force_two_pass=False):
    """SpatialGate forward (eval-mode BatchNorm).

    x:       [N, C, H, W]
    conv_w:  [1, 2, K, K]  (Conv2d(2, 1, K, padding=K//2, bias=False) weight)
    bn_*:    BatchNorm2d(1) affine params + running stats (eval mode)
    """
    N, C, H, W = x.shape
    K = conv_w.shape[-1]
    HW = H * W
    half = K // 2
    P = half * (W + 1)
    Lp = HW + 2 * P
    itemsize = jnp.dtype(x.dtype).itemsize

    # Fold eval-mode BN into scale/shift (stored in SMEM).
    gamma = jnp.asarray(bn_gamma, jnp.float32).reshape(())
    beta = jnp.asarray(bn_beta, jnp.float32).reshape(())
    rmean = jnp.asarray(bn_mean, jnp.float32).reshape(())
    rvar = jnp.asarray(bn_var, jnp.float32).reshape(())
    bn_scale = gamma / jnp.sqrt(rvar + eps)
    bn = jnp.stack([bn_scale, beta - rmean * bn_scale])              # (2,)
    w_flat = conv_w.astype(jnp.float32).reshape(-1)                  # (2*K*K,)

    # Per-dj column-validity masks for the flattened convolution (constants).
    col = np.arange(HW, dtype=np.int64) % W
    colmask = jnp.asarray(np.stack(
        [((col >= half - dj) & (col < W + half - dj)).astype(np.float32)
         for dj in range(K)], axis=0))                               # (K, HW)

    x_flat = x.reshape(N, C, HW)                                     # lane-dense view
    budget = _vmem_budget_bytes()

    # Padded VMEM footprint of the fused per-batch slab (double-buffered in+out).
    slab = _round_up(C, 8) * _round_up(HW, 128) * itemsize
    fused_vmem = (4 * slab                                           # x + out, 2x buffered
                  + 2 * 8 * _round_up(HW, 128) * 4                   # colmask
                  + 8 * _round_up(Lp, 128) * 4)                      # pad scratch
    use_fused = (not force_two_pass) and fused_vmem <= (budget * 9) // 10

    if use_fused:
        # ---- Single fused pass: x read once, written once. ----------------
        # TODO(synk): for N == 1 on v7x, add a halo'd spatial tile axis so both
        # TensorCores get work.
        out_flat = pl.pallas_call(
            functools.partial(_fused_kernel, C=C, H=H, W=W, K=K),
            out_shape=jax.ShapeDtypeStruct((N, C, HW), x.dtype),
            grid_spec=pltpu.PrefetchScalarGridSpec(
                num_scalar_prefetch=0,
                grid=(N,),
                in_specs=[
                    pl.BlockSpec((K, HW), lambda n: (0, 0)),             # colmask
                    pl.BlockSpec((1, C, HW), lambda n: (n, 0, 0)),       # x slab
                    pl.BlockSpec(memory_space=pltpu.MemorySpace.SMEM),   # conv w
                    pl.BlockSpec(memory_space=pltpu.MemorySpace.SMEM),   # bn
                ],
                out_specs=pl.BlockSpec((1, C, HW), lambda n: (n, 0, 0)),
                scratch_shapes=[pltpu.VMEM((2, Lp), jnp.float32)],
            ),
            compiler_params=pltpu.CompilerParams(
                dimension_semantics=("parallel",),
                vmem_limit_bytes=budget,
            ),
            cost_estimate=pl.CostEstimate(
                flops=int(3 * N * C * HW + 4 * N * K * K * HW),
                transcendentals=int(N * HW),
                bytes_accessed=int(2 * N * C * HW * itemsize + N * HW * 4),
            ),
        )(colmask, x_flat, w_flat, bn)
        return out_flat.reshape(N, C, H, W)

    # ---- Fallback (per-batch slab too large for VMEM): two passes. --------
    # Pass 1: lane-dense channel pooling -> gate map [N, 1, HW].
    row_bytes = _round_up(HW, 128) * itemsize
    tc1 = (_largest_divisor(C, max(8, (budget // 4) // (2 * row_bytes)), step=8)
           or C)
    gate = pl.pallas_call(
        functools.partial(_pool_gate_kernel, C=C, H=H, W=W, K=K),
        out_shape=jax.ShapeDtypeStruct((N, 1, HW), jnp.float32),
        grid_spec=pltpu.PrefetchScalarGridSpec(
            num_scalar_prefetch=0,
            grid=(N, C // tc1),
            in_specs=[
                pl.BlockSpec((K, HW), lambda n, c: (0, 0)),
                pl.BlockSpec((1, tc1, HW), lambda n, c: (n, c, 0)),
                pl.BlockSpec(memory_space=pltpu.MemorySpace.SMEM),
                pl.BlockSpec(memory_space=pltpu.MemorySpace.SMEM),
            ],
            out_specs=pl.BlockSpec((1, 1, HW), lambda n, c: (n, 0, 0)),
            scratch_shapes=[
                pltpu.VMEM((1, HW), jnp.float32),          # running max
                pltpu.VMEM((1, HW), jnp.float32),          # running sum
                pltpu.VMEM((2, Lp), jnp.float32),          # padded pooled maps
            ],
        ),
        compiler_params=pltpu.CompilerParams(
            dimension_semantics=("parallel", "arbitrary"),
            vmem_limit_bytes=budget,
        ),
        cost_estimate=pl.CostEstimate(
            flops=int(2 * N * C * HW + 4 * N * K * K * HW),
            transcendentals=int(N * HW),
            bytes_accessed=int(N * C * HW * itemsize + N * HW * 4),
        ),
    )(colmask, x_flat, w_flat, bn)

    # Pass 2: out = x * gate with large lane-dense tiles.
    if HW * itemsize <= (4 << 20):
        thw = HW                                           # full spatial extent
    else:
        thw = _largest_divisor(HW, 8192, step=128) or HW
    blk_row = _round_up(thw, 128) * itemsize
    # If the spatial tile isn't lane-aligned, maximize the channel tile so the
    # single masked lane group amortizes over many sublanes.
    blk_cap = (4 << 20) if thw % 128 == 0 else max(4 << 20, budget // 6)
    tc2 = _largest_divisor(C, max(8, blk_cap // blk_row), step=8) or C

    out_flat = pl.pallas_call(
        _apply_gate_kernel,
        out_shape=jax.ShapeDtypeStruct((N, C, HW), x.dtype),
        grid_spec=pltpu.PrefetchScalarGridSpec(
            num_scalar_prefetch=0,
            grid=(N, C // tc2, HW // thw),
            in_specs=[
                pl.BlockSpec((1, tc2, thw), lambda n, c, s: (n, c, s)),
                pl.BlockSpec((1, 1, thw), lambda n, c, s: (n, 0, s)),
            ],
            out_specs=pl.BlockSpec((1, tc2, thw), lambda n, c, s: (n, c, s)),
        ),
        compiler_params=pltpu.CompilerParams(
            dimension_semantics=("parallel", "parallel", "parallel"),
            vmem_limit_bytes=budget,
        ),
        cost_estimate=pl.CostEstimate(
            flops=int(N * C * HW),
            transcendentals=0,
            bytes_accessed=int(2 * N * C * HW * itemsize + N * HW * 4),
        ),
    )(x_flat, gate)
    return out_flat.reshape(N, C, H, W)


def _reference(x, conv_w, gamma, beta, mean, var, eps=1e-5):
    mx = jnp.max(x, axis=1, keepdims=True)
    mn = jnp.mean(x, axis=1, keepdims=True)
    xc = jnp.concatenate([mx, mn], axis=1)                          # [N, 2, H, W]
    pad = conv_w.shape[-1] // 2
    y = lax.conv_general_dilated(
        xc, conv_w, window_strides=(1, 1),
        padding=((pad, pad), (pad, pad)),
        dimension_numbers=("NCHW", "OIHW", "NCHW"))                 # [N, 1, H, W]
    y = (y - mean) / jnp.sqrt(var + eps) * gamma + beta
    return x * jax.nn.sigmoid(y)


if __name__ == "__main__":
    N, C, H, W = 2, 4, 16, 16
    K = 7
    key = jax.random.PRNGKey(0)
    kx, kw = jax.random.split(key)
    x = jax.random.normal(kx, (N, C, H, W), dtype=jnp.float32)
    conv_w = jax.random.normal(kw, (1, 2, K, K), dtype=jnp.float32) * 0.1
    bn_gamma = jnp.float32(1.3)
    bn_beta = jnp.float32(-0.05)
    bn_mean = jnp.float32(0.02)
    bn_var = jnp.float32(0.9)

    ref = _reference(x, conv_w, bn_gamma, bn_beta, bn_mean, bn_var)

    # Primary (fused) path.
    out = jax.block_until_ready(
        spatial_gate(x, conv_w, bn_gamma, bn_beta, bn_mean, bn_var))
    assert out.shape == (N, C, H, W)
    err = float(jnp.max(jnp.abs(out - ref)))
    assert err < 1e-4, f"fused path max abs err {err}"

    # Also exercise the two-pass fallback (used only for very large slabs).
    out2 = jax.block_until_ready(
        spatial_gate(x, conv_w, bn_gamma, bn_beta, bn_mean, bn_var,
                     force_two_pass=True))
    err2 = float(jnp.max(jnp.abs(out2 - ref)))
    assert err2 < 1e-4, f"two-pass path max abs err {err2}"

    print("KERNEL_OK")
</pallas_src>

<mosaic_0001>
module attributes {stable_mosaic.version = 11 : i64} {
  func.func @_fused_kernel(%arg0: i32, %arg1: memref<7x256xf32, #tpu.memory_space<vmem>>, %arg2: memref<1x4x256xf32, #tpu.memory_space<vmem>>, %arg3: memref<98xf32, #tpu.memory_space<smem>>, %arg4: memref<2xf32, #tpu.memory_space<smem>>, %arg5: memref<1x4x256xf32, #tpu.memory_space<vmem>>, %arg6: memref<2x358xf32, #tpu.memory_space<vmem>>) attributes {dimension_semantics = [#tpu.dimension_semantics<parallel>], iteration_bounds = array<i64: 2>, scalar_prefetch = 0 : i64, scratch_operands = 1 : i64, tpu.core_type = #tpu.core_type<tc>, window_params = [{pipeline_mode = #tpu.pipeline_mode<synchronous>, transform_indices = @transform_0, window_bounds = array<i64: 7, 256>}, {transform_indices = @transform_1, window_bounds = array<i64: 1, 4, 256>}, {transform_indices = @transform_2, window_bounds = array<i64: 98>}, {transform_indices = @transform_3, window_bounds = array<i64: 2>}, {transform_indices = @transform_4, window_bounds = array<i64: 1, 4, 256>}]} {
    %c0 = arith.constant 0 : index
    %c0_0 = arith.constant 0 : index
    %c0_1 = arith.constant 0 : index
    %0 = vector.load %arg2[%c0, %c0_0, %c0_1] : memref<1x4x256xf32, #tpu.memory_space<vmem>>, vector<1x4x256xf32>
    %1 = vector.shape_cast %0 : vector<1x4x256xf32> to vector<4x256xf32>
    %cst = arith.constant dense<0xFF800000> : vector<256xf32>
    %2 = vector.multi_reduction <maximumf>, %1, %cst [0] : vector<4x256xf32> to vector<256xf32>
    %3 = vector.shape_cast %2 : vector<256xf32> to vector<1x256xf32>
    %cst_2 = arith.constant dense<0.000000e+00> : vector<256xf32>
    %4 = vector.multi_reduction <add>, %1, %cst_2 [0] : vector<4x256xf32> to vector<256xf32>
    %5 = vector.shape_cast %4 : vector<256xf32> to vector<1x256xf32>
    %cst_3 = arith.constant 2.500000e-01 : f32
    %6 = vector.broadcast %cst_3 : f32 to vector<1x256xf32>
    %7 = arith.mulf %5, %6 : vector<1x256xf32>
    %cst_4 = arith.constant 0.000000e+00 : f32
    %8 = vector.broadcast %cst_4 : f32 to vector<2x51xf32>
    %c0_5 = arith.constant 0 : index
    %c0_6 = arith.constant 0 : index
    %9 = vector.load %arg6[%c0_5, %c0_6] : memref<2x358xf32, #tpu.memory_space<vmem>>, vector<2x51xf32>
    tpu.vector_store %arg6[%c0_5, %c0_6], %8 {strides = array<i32>} : memref<2x358xf32, #tpu.memory_space<vmem>>, vector<2x51xf32>,
    %cst_7 = arith.constant 0.000000e+00 : f32
    %10 = vector.broadcast %cst_7 : f32 to vector<2x51xf32>
    %c0_8 = arith.constant 0 : index
    %c307 = arith.constant 307 : index
    %11 = vector.load %arg6[%c0_8, %c307] : memref<2x358xf32, #tpu.memory_space<vmem>>, vector<2x51xf32>
    tpu.vector_store %arg6[%c0_8, %c307], %10 {strides = array<i32>} : memref<2x358xf32, #tpu.memory_space<vmem>>, vector<2x51xf32>,
    %c0_9 = arith.constant 0 : index
    %c51 = arith.constant 51 : index
    %12 = vector.load %arg6[%c0_9, %c51] : memref<2x358xf32, #tpu.memory_space<vmem>>, vector<1x256xf32>
    tpu.vector_store %arg6[%c0_9, %c51], %3 {strides = array<i32>} : memref<2x358xf32, #tpu.memory_space<vmem>>, vector<1x256xf32>,
    %c1 = arith.constant 1 : index
    %c51_10 = arith.constant 51 : index
    %13 = vector.load %arg6[%c1, %c51_10] : memref<2x358xf32, #tpu.memory_space<vmem>>, vector<1x256xf32>
    tpu.vector_store %arg6[%c1, %c51_10], %7 {strides = array<i32>} : memref<2x358xf32, #tpu.memory_space<vmem>>, vector<1x256xf32>,
    %cst_11 = arith.constant 0.000000e+00 : f32
    %14 = vector.broadcast %cst_11 : f32 to vector<1x256xf32>
    %cst_12 = arith.constant 0.000000e+00 : f32
    %15 = vector.broadcast %cst_12 : f32 to vector<1x256xf32>
    %c0_13 = arith.constant 0 : index
    %16 = memref.load %arg3[%c0_13] : memref<98xf32, #tpu.memory_space<smem>>
    %c0_14 = arith.constant 0 : index
    %c0_15 = arith.constant 0 : index
    %17 = vector.load %arg6[%c0_14, %c0_15] : memref<2x358xf32, #tpu.memory_space<vmem>>, vector<1x256xf32>
    %18 = vector.broadcast %16 : f32 to vector<1x256xf32>
    %19 = arith.mulf %18, %17 : vector<1x256xf32>
    %20 = arith.addf %15, %19 : vector<1x256xf32>
    %c7 = arith.constant 7 : index
    %21 = memref.load %arg3[%c7] : memref<98xf32, #tpu.memory_space<smem>>
    %c0_16 = arith.constant 0 : index
    %c16 = arith.constant 16 : index
    %22 = vector.load %arg6[%c0_16, %c16] : memref<2x358xf32, #tpu.memory_space<vmem>>, vector<1x256xf32>
    %23 = vector.broadcast %21 : f32 to vector<1x256xf32>
    %24 = arith.mulf %23, %22 : vector<1x256xf32>
    %25 = arith.addf %20, %24 : vector<1x256xf32>
    %c14 = arith.constant 14 : index
    %26 = memref.load %arg3[%c14] : memref<98xf32, #tpu.memory_space<smem>>
    %c0_17 = arith.constant 0 : index
    %c32 = arith.constant 32 : index
    %27 = vector.load %arg6[%c0_17, %c32] : memref<2x358xf32, #tpu.memory_space<vmem>>, vector<1x256xf32>
    %28 = vector.broadcast %26 : f32 to vector<1x256xf32>
    %29 = arith.mulf %28, %27 : vector<1x256xf32>
    %30 = arith.addf %25, %29 : vector<1x256xf32>
    %c21 = arith.constant 21 : index
    %31 = memref.load %arg3[%c21] : memref<98xf32, #tpu.memory_space<smem>>
    %c0_18 = arith.constant 0 : index
    %c48 = arith.constant 48 : index
    %32 = vector.load %arg6[%c0_18, %c48] : memref<2x358xf32, #tpu.memory_space<vmem>>, vector<1x256xf32>
    %33 = vector.broadcast %31 : f32 to vector<1x256xf32>
    %34 = arith.mulf %33, %32 : vector<1x256xf32>
    %35 = arith.addf %30, %34 : vector<1x256xf32>
    %c28 = arith.constant 28 : index
    %36 = memref.load %arg3[%c28] : memref<98xf32, #tpu.memory_space<smem>>
    %c0_19 = arith.constant 0 : index
    %c64 = arith.constant 64 : index
    %37 = vector.load %arg6[%c0_19, %c64] : memref<2x358xf32, #tpu.memory_space<vmem>>, vector<1x256xf32>
    %38 = vector.broadcast %36 : f32 to vector<1x256xf32>
    %39 = arith.mulf %38, %37 : vector<1x256xf32>
    %40 = arith.addf %35, %39 : vector<1x256xf32>
    %c35 = arith.constant 35 : index
    %41 = memref.load %arg3[%c35] : memref<98xf32, #tpu.memory_space<smem>>
    %c0_20 = arith.constant 0 : index
    %c80 = arith.constant 80 : index
    %42 = vector.load %arg6[%c0_20, %c80] : memref<2x358xf32, #tpu.memory_space<vmem>>, vector<1x256xf32>
    %43 = vector.broadcast %41 : f32 to vector<1x256xf32>
    %44 = arith.mulf %43, %42 : vector<1x256xf32>
    %45 = arith.addf %40, %44 : vector<1x256xf32>
    %c42 = arith.constant 42 : index
    %46 = memref.load %arg3[%c42] : memref<98xf32, #tpu.memory_space<smem>>
    %c0_21 = arith.constant 0 : index
    %c96 = arith.constant 96 : index
    %47 = vector.load %arg6[%c0_21, %c96] : memref<2x358xf32, #tpu.memory_space<vmem>>, vector<1x256xf32>
    %48 = vector.broadcast %46 : f32 to vector<1x256xf32>
    %49 = arith.mulf %48, %47 : vector<1x256xf32>
    %50 = arith.addf %45, %49 : vector<1x256xf32>
    %c49 = arith.constant 49 : index
    %51 = memref.load %arg3[%c49] : memref<98xf32, #tpu.memory_space<smem>>
    %c1_22 = arith.constant 1 : index
    %c0_23 = arith.constant 0 : index
    %52 = vector.load %arg6[%c1_22, %c0_23] : memref<2x358xf32, #tpu.memory_space<vmem>>, vector<1x256xf32>
    %53 = vector.broadcast %51 : f32 to vector<1x256xf32>
    %54 = arith.mulf %53, %52 : vector<1x256xf32>
    %55 = arith.addf %50, %54 : vector<1x256xf32>
    %c56 = arith.constant 56 : index
    %56 = memref.load %arg3[%c56] : memref<98xf32, #tpu.memory_space<smem>>
    %c1_24 = arith.constant 1 : index
    %c16_25 = arith.constant 16 : index
    %57 = vector.load %arg6[%c1_24, %c16_25] : memref<2x358xf32, #tpu.memory_space<vmem>>, vector<1x256xf32>
    %58 = vector.broadcast %56 : f32 to vector<1x256xf32>
    %59 = arith.mulf %58, %57 : vector<1x256xf32>
    %60 = arith.addf %55, %59 : vector<1x256xf32>
    %c63 = arith.constant 63 : index
    %61 = memref.load %arg3[%c63] : memref<98xf32, #tpu.memory_space<smem>>
    %c1_26 = arith.constant 1 : index
    %c32_27 = arith.constant 32 : index
    %62 = vector.load %arg6[%c1_26, %c32_27] : memref<2x358xf32, #tpu.memory_space<vmem>>, vector<1x256xf32>
    %63 = vector.broadcast %61 : f32 to vector<1x256xf32>
    %64 = arith.mulf %63, %62 : vector<1x256xf32>
    %65 = arith.addf %60, %64 : vector<1x256xf32>
    %c70 = arith.constant 70 : index
    %66 = memref.load %arg3[%c70] : memref<98xf32, #tpu.memory_space<smem>>
    %c1_28 = arith.constant 1 : index
    %c48_29 = arith.constant 48 : index
    %67 = vector.load %arg6[%c1_28, %c48_29] : memref<2x358xf32, #tpu.memory_space<vmem>>, vector<1x256xf32>
    %68 = vector.broadcast %66 : f32 to vector<1x256xf32>
    %69 = arith.mulf %68, %67 : vector<1x256xf32>
    %70 = arith.addf %65, %69 : vector<1x256xf32>
    %c77 = arith.constant 77 : index
    %71 = memref.load %arg3[%c77] : memref<98xf32, #tpu.memory_space<smem>>
    %c1_30 = arith.constant 1 : index
    %c64_31 = arith.constant 64 : index
    %72 = vector.load %arg6[%c1_30, %c64_31] : memref<2x358xf32, #tpu.memory_space<vmem>>, vector<1x256xf32>
    %73 = vector.broadcast %71 : f32 to vector<1x256xf32>
    %74 = arith.mulf %73, %72 : vector<1x256xf32>
    %75 = arith.addf %70, %74 : vector<1x256xf32>
    %c84 = arith.constant 84 : index
    %76 = memref.load %arg3[%c84] : memref<98xf32, #tpu.memory_space<smem>>
    %c1_32 = arith.constant 1 : index
    %c80_33 = arith.constant 80 : index
    %77 = vector.load %arg6[%c1_32, %c80_33] : memref<2x358xf32, #tpu.memory_space<vmem>>, vector<1x256xf32>
    %78 = vector.broadcast %76 : f32 to vector<1x256xf32>
    %79 = arith.mulf %78, %77 : vector<1x256xf32>
    %80 = arith.addf %75, %79 : vector<1x256xf32>
    %c91 = arith.constant 91 : index
    %81 = memref.load %arg3[%c91] : memref<98xf32, #tpu.memory_space<smem>>
    %c1_34 = arith.constant 1 : index
    %c96_35 = arith.constant 96 : index
    %82 = vector.load %arg6[%c1_34, %c96_35] : memref<2x358xf32, #tpu.memory_space<vmem>>, vector<1x256xf32>
    %83 = vector.broadcast %81 : f32 to vector<1x256xf32>
    %84 = arith.mulf %83, %82 : vector<1x256xf32>
    %85 = arith.addf %80, %84 : vector<1x256xf32>
    %c0_36 = arith.constant 0 : index
    %c0_37 = arith.constant 0 : index
    %86 = vector.load %arg1[%c0_36, %c0_37] : memref<7x256xf32, #tpu.memory_space<vmem>>, vector<1x256xf32>
    %87 = arith.mulf %86, %85 : vector<1x256xf32>
    %88 = arith.addf %14, %87 : vector<1x256xf32>
    %cst_38 = arith.constant 0.000000e+00 : f32
    %89 = vector.broadcast %cst_38 : f32 to vector<1x256xf32>
    %c1_39 = arith.constant 1 : index
    %90 = memref.load %arg3[%c1_39] : memref<98xf32, #tpu.memory_space<smem>>
    %c0_40 = arith.constant 0 : index
    %c1_41 = arith.constant 1 : index
    %91 = vector.load %arg6[%c0_40, %c1_41] : memref<2x358xf32, #tpu.memory_space<vmem>>, vector<1x256xf32>
    %92 = vector.broadcast %90 : f32 to vector<1x256xf32>
    %93 = arith.mulf %92, %91 : vector<1x256xf32>
    %94 = arith.addf %89, %93 : vector<1x256xf32>
    %c8 = arith.constant 8 : index
    %95 = memref.load %arg3[%c8] : memref<98xf32, #tpu.memory_space<smem>>
    %c0_42 = arith.constant 0 : index
    %c17 = arith.constant 17 : index
    %96 = vector.load %arg6[%c0_42, %c17] : memref<2x358xf32, #tpu.memory_space<vmem>>, vector<1x256xf32>
    %97 = vector.broadcast %95 : f32 to vector<1x256xf32>
    %98 = arith.mulf %97, %96 : vector<1x256xf32>
    %99 = arith.addf %94, %98 : vector<1x256xf32>
    %c15 = arith.constant 15 : index
    %100 = memref.load %arg3[%c15] : memref<98xf32, #tpu.memory_space<smem>>
    %c0_43 = arith.constant 0 : index
    %c33 = arith.constant 33 : index
    %101 = vector.load %arg6[%c0_43, %c33] : memref<2x358xf32, #tpu.memory_space<vmem>>, vector<1x256xf32>
    %102 = vector.broadcast %100 : f32 to vector<1x256xf32>
    %103 = arith.mulf %102, %101 : vector<1x256xf32>
    %104 = arith.addf %99, %103 : vector<1x256xf32>
    %c22 = arith.constant 22 : index
    %105 = memref.load %arg3[%c22] : memref<98xf32, #tpu.memory_space<smem>>
    %c0_44 = arith.constant 0 : index
    %c49_45 = arith.constant 49 : index
    %106 = vector.load %arg6[%c0_44, %c49_45] : memref<2x358xf32, #tpu.memory_space<vmem>>, vector<1x256xf32>
    %107 = vector.broadcast %105 : f32 to vector<1x256xf32>
    %108 = arith.mulf %107, %106 : vector<1x256xf32>
    %109 = arith.addf %104, %108 : vector<1x256xf32>
    %c29 = arith.constant 29 : index
    %110 = memref.load %arg3[%c29] : memref<98xf32, #tpu.memory_space<smem>>
    %c0_46 = arith.constant 0 : index
    %c65 = arith.constant 65 : index
    %111 = vector.load %arg6[%c0_46, %c65] : memref<2x358xf32, #tpu.memory_space<vmem>>, vector<1x256xf32>
    %112 = vector.broadcast %110 : f32 to vector<1x256xf32>
    %113 = arith.mulf %112, %111 : vector<1x256xf32>
    %114 = arith.addf %109, %113 : vector<1x256xf32>
    %c36 = arith.constant 36 : index
    %115 = memref.load %arg3[%c36] : memref<98xf32, #tpu.memory_space<smem>>
    %c0_47 = arith.constant 0 : index
    %c81 = arith.constant 81 : index
    %116 = vector.load %arg6[%c0_47, %c81] : memref<2x358xf32, #tpu.memory_space<vmem>>, vector<1x256xf32>
    %117 = vector.broadcast %115 : f32 to vector<1x256xf32>
    %118 = arith.mulf %117, %116 : vector<1x256xf32>
    %119 = arith.addf %114, %118 : vector<1x256xf32>
    %c43 = arith.constant 43 : index
    %120 = memref.load %arg3[%c43] : memref<98xf32, #tpu.memory_space<smem>>
    %c0_48 = arith.constant 0 : index
    %c97 = arith.constant 97 : index
    %121 = vector.load %arg6[%c0_48, %c97] : memref<2x358xf32, #tpu.memory_space<vmem>>, vector<1x256xf32>
    %122 = vector.broadcast %120 : f32 to vector<1x256xf32>
    %123 = arith.mulf %122, %121 : vector<1x256xf32>
    %124 = arith.addf %119, %123 : vector<1x256xf32>
    %c50 = arith.constant 50 : index
    %125 = memref.load %arg3[%c50] : memref<98xf32, #tpu.memory_space<smem>>
    %c1_49 = arith.constant 1 : index
    %c1_50 = arith.constant 1 : index
    %126 = vector.load %arg6[%c1_49, %c1_50] : memref<2x358xf32, #tpu.memory_space<vmem>>, vector<1x256xf32>
    %127 = vector.broadcast %125 : f32 to vector<1x256xf32>
    %128 = arith.mulf %127, %126 : vector<1x256xf32>
    %129 = arith.addf %124, %128 : vector<1x256xf32>
    %c57 = arith.constant 57 : index
    %130 = memref.load %arg3[%c57] : memref<98xf32, #tpu.memory_space<smem>>
    %c1_51 = arith.constant 1 : index
    %c17_52 = arith.constant 17 : index
    %131 = vector.load %arg6[%c1_51, %c17_52] : memref<2x358xf32, #tpu.memory_space<vmem>>, vector<1x256xf32>
    %132 = vector.broadcast %130 : f32 to vector<1x256xf32>
    %133 = arith.mulf %132, %131 : vector<1x256xf32>
    %134 = arith.addf %129, %133 : vector<1x256xf32>
    %c64_53 = arith.constant 64 : index
    %135 = memref.load %arg3[%c64_53] : memref<98xf32, #tpu.memory_space<smem>>
    %c1_54 = arith.constant 1 : index
    %c33_55 = arith.constant 33 : index
    %136 = vector.load %arg6[%c1_54, %c33_55] : memref<2x358xf32, #tpu.memory_space<vmem>>, vector<1x256xf32>
    %137 = vector.broadcast %135 : f32 to vector<1x256xf32>
    %138 = arith.mulf %137, %136 : vector<1x256xf32>
    %139 = arith.addf %134, %138 : vector<1x256xf32>
    %c71 = arith.constant 71 : index
    %140 = memref.load %arg3[%c71] : memref<98xf32, #tpu.memory_space<smem>>
    %c1_56 = arith.constant 1 : index
    %c49_57 = arith.constant 49 : index
    %141 = vector.load %arg6[%c1_56, %c49_57] : memref<2x358xf32, #tpu.memory_space<vmem>>, vector<1x256xf32>
    %142 = vector.broadcast %140 : f32 to vector<1x256xf32>
    %143 = arith.mulf %142, %141 : vector<1x256xf32>
    %144 = arith.addf %139, %143 : vector<1x256xf32>
    %c78 = arith.constant 78 : index
    %145 = memref.load %arg3[%c78] : memref<98xf32, #tpu.memory_space<smem>>
    %c1_58 = arith.constant 1 : index
    %c65_59 = arith.constant 65 : index
    %146 = vector.load %arg6[%c1_58, %c65_59] : memref<2x358xf32, #tpu.memory_space<vmem>>, vector<1x256xf32>
    %147 = vector.broadcast %145 : f32 to vector<1x256xf32>
    %148 = arith.mulf %147, %146 : vector<1x256xf32>
    %149 = arith.addf %144, %148 : vector<1x256xf32>
    %c85 = arith.constant 85 : index
    %150 = memref.load %arg3[%c85] : memref<98xf32, #tpu.memory_space<smem>>
    %c1_60 = arith.constant 1 : index
    %c81_61 = arith.constant 81 : index
    %151 = vector.load %arg6[%c1_60, %c81_61] : memref<2x358xf32, #tpu.memory_space<vmem>>, vector<1x256xf32>
    %152 = vector.broadcast %150 : f32 to vector<1x256xf32>
    %153 = arith.mulf %152, %151 : vector<1x256xf32>
    %154 = arith.addf %149, %153 : vector<1x256xf32>
    %c92 = arith.constant 92 : index
    %155 = memref.load %arg3[%c92] : memref<98xf32, #tpu.memory_space<smem>>
    %c1_62 = arith.constant 1 : index
    %c97_63 = arith.constant 97 : index
    %156 = vector.load %arg6[%c1_62, %c97_63] : memref<2x358xf32, #tpu.memory_space<vmem>>, vector<1x256xf32>
    %157 = vector.broadcast %155 : f32 to vector<1x256xf32>
    %158 = arith.mulf %157, %156 : vector<1x256xf32>
    %159 = arith.addf %154, %158 : vector<1x256xf32>
    %c1_64 = arith.constant 1 : index
    %c0_65 = arith.constant 0 : index
    %160 = vector.load %arg1[%c1_64, %c0_65] : memref<7x256xf32, #tpu.memory_space<vmem>>, vector<1x256xf32>
    %161 = arith.mulf %160, %159 : vector<1x256xf32>
    %162 = arith.addf %88, %161 : vector<1x256xf32>
    %cst_66 = arith.constant 0.000000e+00 : f32
    %163 = vector.broadcast %cst_66 : f32 to vector<1x256xf32>
    %c2 = arith.constant 2 : index
    %164 = memref.load %arg3[%c2] : memref<98xf32, #tpu.memory_space<smem>>
    %c0_67 = arith.constant 0 : index
    %c2_68 = arith.constant 2 : index
    %165 = vector.load %arg6[%c0_67, %c2_68] : memref<2x358xf32, #tpu.memory_space<vmem>>, vector<1x256xf32>
    %166 = vector.broadcast %164 : f32 to vector<1x256xf32>
    %167 = arith.mulf %166, %165 : vector<1x256xf32>
    %168 = arith.addf %163, %167 : vector<1x256xf32>
    %c9 = arith.constant 9 : index
    %169 = memref.load %arg3[%c9] : memref<98xf32, #tpu.memory_space<smem>>
    %c0_69 = arith.constant 0 : index
    %c18 = arith.constant 18 : index
    %170 = vector.load %arg6[%c0_69, %c18] : memref<2x358xf32, #tpu.memory_space<vmem>>, vector<1x256xf32>
    %171 = vector.broadcast %169 : f32 to vector<1x256xf32>
    %172 = arith.mulf %171, %170 : vector<1x256xf32>
    %173 = arith.addf %168, %172 : vector<1x256xf32>
    %c16_70 = arith.constant 16 : index
    %174 = memref.load %arg3[%c16_70] : memref<98xf32, #tpu.memory_space<smem>>
    %c0_71 = arith.constant 0 : index
    %c34 = arith.constant 34 : index
    %175 = vector.load %arg6[%c0_71, %c34] : memref<2x358xf32, #tpu.memory_space<vmem>>, vector<1x256xf32>
    %176 = vector.broadcast %174 : f32 to vector<1x256xf32>
    %177 = arith.mulf %176, %175 : vector<1x256xf32>
    %178 = arith.addf %173, %177 : vector<1x256xf32>
    %c23 = arith.constant 23 : index
    %179 = memref.load %arg3[%c23] : memref<98xf32, #tpu.memory_space<smem>>
    %c0_72 = arith.constant 0 : index
    %c50_73 = arith.constant 50 : index
    %180 = vector.load %arg6[%c0_72, %c50_73] : memref<2x358xf32, #tpu.memory_space<vmem>>, vector<1x256xf32>
    %181 = vector.broadcast %179 : f32 to vector<1x256xf32>
    %182 = arith.mulf %181, %180 : vector<1x256xf32>
    %183 = arith.addf %178, %182 : vector<1x256xf32>
    %c30 = arith.constant 30 : index
    %184 = memref.load %arg3[%c30] : memref<98xf32, #tpu.memory_space<smem>>
    %c0_74 = arith.constant 0 : index
    %c66 = arith.constant 66 : index
    %185 = vector.load %arg6[%c0_74, %c66] : memref<2x358xf32, #tpu.memory_space<vmem>>, vector<1x256xf32>
    %186 = vector.broadcast %184 : f32 to vector<1x256xf32>
    %187 = arith.mulf %186, %185 : vector<1x256xf32>
    %188 = arith.addf %183, %187 : vector<1x256xf32>
    %c37 = arith.constant 37 : index
    %189 = memref.load %arg3[%c37] : memref<98xf32, #tpu.memory_space<smem>>
    %c0_75 = arith.constant 0 : index
    %c82 = arith.constant 82 : index
    %190 = vector.load %arg6[%c0_75, %c82] : memref<2x358xf32, #tpu.memory_space<vmem>>, vector<1x256xf32>
    %191 = vector.broadcast %189 : f32 to vector<1x256xf32>
    %192 = arith.mulf %191, %190 : vector<1x256xf32>
    %193 = arith.addf %188, %192 : vector<1x256xf32>
    %c44 = arith.constant 44 : index
    %194 = memref.load %arg3[%c44] : memref<98xf32, #tpu.memory_space<smem>>
    %c0_76 = arith.constant 0 : index
    %c98 = arith.constant 98 : index
    %195 = vector.load %arg6[%c0_76, %c98] : memref<2x358xf32, #tpu.memory_space<vmem>>, vector<1x256xf32>
    %196 = vector.broadcast %194 : f32 to vector<1x256xf32>
    %197 = arith.mulf %196, %195 : vector<1x256xf32>
    %198 = arith.addf %193, %197 : vector<1x256xf32>
    %c51_77 = arith.constant 51 : index
    %199 = memref.load %arg3[%c51_77] : memref<98xf32, #tpu.memory_space<smem>>
    %c1_78 = arith.constant 1 : index
    %c2_79 = arith.constant 2 : index
    %200 = vector.load %arg6[%c1_78, %c2_79] : memref<2x358xf32, #tpu.memory_space<vmem>>, vector<1x256xf32>
    %201 = vector.broadcast %199 : f32 to vector<1x256xf32>
    %202 = arith.mulf %201, %200 : vector<1x256xf32>
    %203 = arith.addf %198, %202 : vector<1x256xf32>
    %c58 = arith.constant 58 : index
    %204 = memref.load %arg3[%c58] : memref<98xf32, #tpu.memory_space<smem>>
    %c1_80 = arith.constant 1 : index
    %c18_81 = arith.constant 18 : index
    %205 = vector.load %arg6[%c1_80, %c18_81] : memref<2x358xf32, #tpu.memory_space<vmem>>, vector<1x256xf32>
    %206 = vector.broadcast %204 : f32 to vector<1x256xf32>
    %207 = arith.mulf %206, %205 : vector<1x256xf32>
    %208 = arith.addf %203, %207 : vector<1x256xf32>
    %c65_82 = arith.constant 65 : index
    %209 = memref.load %arg3[%c65_82] : memref<98xf32, #tpu.memory_space<smem>>
    %c1_83 = arith.constant 1 : index
    %c34_84 = arith.constant 34 : index
    %210 = vector.load %arg6[%c1_83, %c34_84] : memref<2x358xf32, #tpu.memory_space<vmem>>, vector<1x256xf32>
    %211 = vector.broadcast %209 : f32 to vector<1x256xf32>
    %212 = arith.mulf %211, %210 : vector<1x256xf32>
    %213 = arith.addf %208, %212 : vector<1x256xf32>
    %c72 = arith.constant 72 : index
    %214 = memref.load %arg3[%c72] : memref<98xf32, #tpu.memory_space<smem>>
    %c1_85 = arith.constant 1 : index
    %c50_86 = arith.constant 50 : index
    %215 = vector.load %arg6[%c1_85, %c50_86] : memref<2x358xf32, #tpu.memory_space<vmem>>, vector<1x256xf32>
    %216 = vector.broadcast %214 : f32 to vector<1x256xf32>
    %217 = arith.mulf %216, %215 : vector<1x256xf32>
    %218 = arith.addf %213, %217 : vector<1x256xf32>
    %c79 = arith.constant 79 : index
    %219 = memref.load %arg3[%c79] : memref<98xf32, #tpu.memory_space<smem>>
    %c1_87 = arith.constant 1 : index
    %c66_88 = arith.constant 66 : index
    %220 = vector.load %arg6[%c1_87, %c66_88] : memref<2x358xf32, #tpu.memory_space<vmem>>, vector<1x256xf32>
    %221 = vector.broadcast %219 : f32 to vector<1x256xf32>
    %222 = arith.mulf %221, %220 : vector<1x256xf32>
    %223 = arith.addf %218, %222 : vector<1x256xf32>
    %c86 = arith.constant 86 : index
    %224 = memref.load %arg3[%c86] : memref<98xf32, #tpu.memory_space<smem>>
    %c1_89 = arith.constant 1 : index
    %c82_90 = arith.constant 82 : index
    %225 = vector.load %arg6[%c1_89, %c82_90] : memref<2x358xf32, #tpu.memory_space<vmem>>, vector<1x256xf32>
    %226 = vector.broadcast %224 : f32 to vector<1x256xf32>
    %227 = arith.mulf %226, %225 : vector<1x256xf32>
    %228 = arith.addf %223, %227 : vector<1x256xf32>
    %c93 = arith.constant 93 : index
    %229 = memref.load %arg3[%c93] : memref<98xf32, #tpu.memory_space<smem>>
    %c1_91 = arith.constant 1 : index
    %c98_92 = arith.constant 98 : index
    %230 = vector.load %arg6[%c1_91, %c98_92] : memref<2x358xf32, #tpu.memory_space<vmem>>, vector<1x256xf32>
    %231 = vector.broadcast %229 : f32 to vector<1x256xf32>
    %232 = arith.mulf %231, %230 : vector<1x256xf32>
    %233 = arith.addf %228, %232 : vector<1x256xf32>
    %c2_93 = arith.constant 2 : index
    %c0_94 = arith.constant 0 : index
    %234 = vector.load %arg1[%c2_93, %c0_94] : memref<7x256xf32, #tpu.memory_space<vmem>>, vector<1x256xf32>
    %235 = arith.mulf %234, %233 : vector<1x256xf32>
    %236 = arith.addf %162, %235 : vector<1x256xf32>
    %cst_95 = arith.constant 0.000000e+00 : f32
    %237 = vector.broadcast %cst_95 : f32 to vector<1x256xf32>
    %c3 = arith.constant 3 : index
    %238 = memref.load %arg3[%c3] : memref<98xf32, #tpu.memory_space<smem>>
    %c0_96 = arith.constant 0 : index
    %c3_97 = arith.constant 3 : index
    %239 = vector.load %arg6[%c0_96, %c3_97] : memref<2x358xf32, #tpu.memory_space<vmem>>, vector<1x256xf32>
    %240 = vector.broadcast %238 : f32 to vector<1x256xf32>
    %241 = arith.mulf %240, %239 : vector<1x256xf32>
    %242 = arith.addf %237, %241 : vector<1x256xf32>
    %c10 = arith.constant 10 : index
    %243 = memref.load %arg3[%c10] : memref<98xf32, #tpu.memory_space<smem>>
    %c0_98 = arith.constant 0 : index
    %c19 = arith.constant 19 : index
    %244 = vector.load %arg6[%c0_98, %c19] : memref<2x358xf32, #tpu.memory_space<vmem>>, vector<1x256xf32>
    %245 = vector.broadcast %243 : f32 to vector<1x256xf32>
    %246 = arith.mulf %245, %244 : vector<1x256xf32>
    %247 = arith.addf %242, %246 : vector<1x256xf32>
    %c17_99 = arith.constant 17 : index
    %248 = memref.load %arg3[%c17_99] : memref<98xf32, #tpu.memory_space<smem>>
    %c0_100 = arith.constant 0 : index
    %c35_101 = arith.constant 35 : index
    %249 = vector.load %arg6[%c0_100, %c35_101] : memref<2x358xf32, #tpu.memory_space<vmem>>, vector<1x256xf32>
    %250 = vector.broadcast %248 : f32 to vector<1x256xf32>
    %251 = arith.mulf %250, %249 : vector<1x256xf32>
    %252 = arith.addf %247, %251 : vector<1x256xf32>
    %c24 = arith.constant 24 : index
    %253 = memref.load %arg3[%c24] : memref<98xf32, #tpu.memory_space<smem>>
    %c0_102 = arith.constant 0 : index
    %c51_103 = arith.constant 51 : index
    %254 = vector.load %arg6[%c0_102, %c51_103] : memref<2x358xf32, #tpu.memory_space<vmem>>, vector<1x256xf32>
    %255 = vector.broadcast %253 : f32 to vector<1x256xf32>
    %256 = arith.mulf %255, %254 : vector<1x256xf32>
    %257 = arith.addf %252, %256 : vector<1x256xf32>
    %c31 = arith.constant 31 : index
    %258 = memref.load %arg3[%c31] : memref<98xf32, #tpu.memory_space<smem>>
    %c0_104 = arith.constant 0 : index
    %c67 = arith.constant 67 : index
    %259 = vector.load %arg6[%c0_104, %c67] : memref<2x358xf32, #tpu.memory_space<vmem>>, vector<1x256xf32>
    %260 = vector.broadcast %258 : f32 to vector<1x256xf32>
    %261 = arith.mulf %260, %259 : vector<1x256xf32>
    %262 = arith.addf %257, %261 : vector<1x256xf32>
    %c38 = arith.constant 38 : index
    %263 = memref.load %arg3[%c38] : memref<98xf32, #tpu.memory_space<smem>>
    %c0_105 = arith.constant 0 : index
    %c83 = arith.constant 83 : index
    %264 = vector.load %arg6[%c0_105, %c83] : memref<2x358xf32, #tpu.memory_space<vmem>>, vector<1x256xf32>
    %265 = vector.broadcast %263 : f32 to vector<1x256xf32>
    %266 = arith.mulf %265, %264 : vector<1x256xf32>
    %267 = arith.addf %262, %266 : vector<1x256xf32>
    %c45 = arith.constant 45 : index
    %268 = memref.load %arg3[%c45] : memref<98xf32, #tpu.memory_space<smem>>
    %c0_106 = arith.constant 0 : index
    %c99 = arith.constant 99 : index
    %269 = vector.load %arg6[%c0_106, %c99] : memref<2x358xf32, #tpu.memory_space<vmem>>, vector<1x256xf32>
    %270 = vector.broadcast %268 : f32 to vector<1x256xf32>
    %271 = arith.mulf %270, %269 : vector<1x256xf32>
    %272 = arith.addf %267, %271 : vector<1x256xf32>
    %c52 = arith.constant 52 : index
    %273 = memref.load %arg3[%c52] : memref<98xf32, #tpu.memory_space<smem>>
    %c1_107 = arith.constant 1 : index
    %c3_108 = arith.constant 3 : index
    %274 = vector.load %arg6[%c1_107, %c3_108] : memref<2x358xf32, #tpu.memory_space<vmem>>, vector<1x256xf32>
    %275 = vector.broadcast %273 : f32 to vector<1x256xf32>
    %276 = arith.mulf %275, %274 : vector<1x256xf32>
    %277 = arith.addf %272, %276 : vector<1x256xf32>
    %c59 = arith.constant 59 : index
    %278 = memref.load %arg3[%c59] : memref<98xf32, #tpu.memory_space<smem>>
    %c1_109 = arith.constant 1 : index
    %c19_110 = arith.constant 19 : index
    %279 = vector.load %arg6[%c1_109, %c19_110] : memref<2x358xf32, #tpu.memory_space<vmem>>, vector<1x256xf32>
    %280 = vector.broadcast %278 : f32 to vector<1x256xf32>
    %281 = arith.mulf %280, %279 : vector<1x256xf32>
    %282 = arith.addf %277, %281 : vector<1x256xf32>
    %c66_111 = arith.constant 66 : index
    %283 = memref.load %arg3[%c66_111] : memref<98xf32, #tpu.memory_space<smem>>
    %c1_112 = arith.constant 1 : index
    %c35_113 = arith.constant 35 : index
    %284 = vector.load %arg6[%c1_112, %c35_113] : memref<2x358xf32, #tpu.memory_space<vmem>>, vector<1x256xf32>
    %285 = vector.broadcast %283 : f32 to vector<1x256xf32>
    %286 = arith.mulf %285, %284 : vector<1x256xf32>
    %287 = arith.addf %282, %286 : vector<1x256xf32>
    %c73 = arith.constant 73 : index
    %288 = memref.load %arg3[%c73] : memref<98xf32, #tpu.memory_space<smem>>
    %c1_114 = arith.constant 1 : index
    %c51_115 = arith.constant 51 : index
    %289 = vector.load %arg6[%c1_114, %c51_115] : memref<2x358xf32, #tpu.memory_space<vmem>>, vector<1x256xf32>
    %290 = vector.broadcast %288 : f32 to vector<1x256xf32>
    %291 = arith.mulf %290, %289 : vector<1x256xf32>
    %292 = arith.addf %287, %291 : vector<1x256xf32>
    %c80_116 = arith.constant 80 : index
    %293 = memref.load %arg3[%c80_116] : memref<98xf32, #tpu.memory_space<smem>>
    %c1_117 = arith.constant 1 : index
    %c67_118 = arith.constant 67 : index
    %294 = vector.load %arg6[%c1_117, %c67_118] : memref<2x358xf32, #tpu.memory_space<vmem>>, vector<1x256xf32>
    %295 = vector.broadcast %293 : f32 to vector<1x256xf32>
    %296 = arith.mulf %295, %294 : vector<1x256xf32>
    %297 = arith.addf %292, %296 : vector<1x256xf32>
    %c87 = arith.constant 87 : index
    %298 = memref.load %arg3[%c87] : memref<98xf32, #tpu.memory_space<smem>>
    %c1_119 = arith.constant 1 : index
    %c83_120 = arith.constant 83 : index
    %299 = vector.load %arg6[%c1_119, %c83_120] : memref<2x358xf32, #tpu.memory_space<vmem>>, vector<1x256xf32>
    %300 = vector.broadcast %298 : f32 to vector<1x256xf32>
    %301 = arith.mulf %300, %299 : vector<1x256xf32>
    %302 = arith.addf %297, %301 : vector<1x256xf32>
    %c94 = arith.constant 94 : index
    %303 = memref.load %arg3[%c94] : memref<98xf32, #tpu.memory_space<smem>>
    %c1_121 = arith.constant 1 : index
    %c99_122 = arith.constant 99 : index
    %304 = vector.load %arg6[%c1_121, %c99_122] : memref<2x358xf32, #tpu.memory_space<vmem>>, vector<1x256xf32>
    %305 = vector.broadcast %303 : f32 to vector<1x256xf32>
    %306 = arith.mulf %305, %304 : vector<1x256xf32>
    %307 = arith.addf %302, %306 : vector<1x256xf32>
    %c3_123 = arith.constant 3 : index
    %c0_124 = arith.constant 0 : index
    %308 = vector.load %arg1[%c3_123, %c0_124] : memref<7x256xf32, #tpu.memory_space<vmem>>, vector<1x256xf32>
    %309 = arith.mulf %308, %307 : vector<1x256xf32>
    %310 = arith.addf %236, %309 : vector<1x256xf32>
    %cst_125 = arith.constant 0.000000e+00 : f32
    %311 = vector.broadcast %cst_125 : f32 to vector<1x256xf32>
    %c4 = arith.constant 4 : index
    %312 = memref.load %arg3[%c4] : memref<98xf32, #tpu.memory_space<smem>>
    %c0_126 = arith.constant 0 : index
    %c4_127 = arith.constant 4 : index
    %313 = vector.load %arg6[%c0_126, %c4_127] : memref<2x358xf32, #tpu.memory_space<vmem>>, vector<1x256xf32>
    %314 = vector.broadcast %312 : f32 to vector<1x256xf32>
    %315 = arith.mulf %314, %313 : vector<1x256xf32>
    %316 = arith.addf %311, %315 : vector<1x256xf32>
    %c11 = arith.constant 11 : index
    %317 = memref.load %arg3[%c11] : memref<98xf32, #tpu.memory_space<smem>>
    %c0_128 = arith.constant 0 : index
    %c20 = arith.constant 20 : index
    %318 = vector.load %arg6[%c0_128, %c20] : memref<2x358xf32, #tpu.memory_space<vmem>>, vector<1x256xf32>
    %319 = vector.broadcast %317 : f32 to vector<1x256xf32>
    %320 = arith.mulf %319, %318 : vector<1x256xf32>
    %321 = arith.addf %316, %320 : vector<1x256xf32>
    %c18_129 = arith.constant 18 : index
    %322 = memref.load %arg3[%c18_129] : memref<98xf32, #tpu.memory_space<smem>>
    %c0_130 = arith.constant 0 : index
    %c36_131 = arith.constant 36 : index
    %323 = vector.load %arg6[%c0_130, %c36_131] : memref<2x358xf32, #tpu.memory_space<vmem>>, vector<1x256xf32>
    %324 = vector.broadcast %322 : f32 to vector<1x256xf32>
    %325 = arith.mulf %324, %323 : vector<1x256xf32>
    %326 = arith.addf %321, %325 : vector<1x256xf32>
    %c25 = arith.constant 25 : index
    %327 = memref.load %arg3[%c25] : memref<98xf32, #tpu.memory_space<smem>>
    %c0_132 = arith.constant 0 : index
    %c52_133 = arith.constant 52 : index
    %328 = vector.load %arg6[%c0_132, %c52_133] : memref<2x358xf32, #tpu.memory_space<vmem>>, vector<1x256xf32>
    %329 = vector.broadcast %327 : f32 to vector<1x256xf32>
    %330 = arith.mulf %329, %328 : vector<1x256xf32>
    %331 = arith.addf %326, %330 : vector<1x256xf32>
    %c32_134 = arith.constant 32 : index
    %332 = memref.load %arg3[%c32_134] : memref<98xf32, #tpu.memory_space<smem>>
    %c0_135 = arith.constant 0 : index
    %c68 = arith.constant 68 : index
    %333 = vector.load %arg6[%c0_135, %c68] : memref<2x358xf32, #tpu.memory_space<vmem>>, vector<1x256xf32>
    %334 = vector.broadcast %332 : f32 to vector<1x256xf32>
    %335 = arith.mulf %334, %333 : vector<1x256xf32>
    %336 = arith.addf %331, %335 : vector<1x256xf32>
    %c39 = arith.constant 39 : index
    %337 = memref.load %arg3[%c39] : memref<98xf32, #tpu.memory_space<smem>>
    %c0_136 = arith.constant 0 : index
    %c84_137 = arith.constant 84 : index
    %338 = vector.load %arg6[%c0_136, %c84_137] : memref<2x358xf32, #tpu.memory_space<vmem>>, vector<1x256xf32>
    %339 = vector.broadcast %337 : f32 to vector<1x256xf32>
    %340 = arith.mulf %339, %338 : vector<1x256xf32>
    %341 = arith.addf %336, %340 : vector<1x256xf32>
    %c46 = arith.constant 46 : index
    %342 = memref.load %arg3[%c46] : memref<98xf32, #tpu.memory_space<smem>>
    %c0_138 = arith.constant 0 : index
    %c100 = arith.constant 100 : index
    %343 = vector.load %arg6[%c0_138, %c100] : memref<2x358xf32, #tpu.memory_space<vmem>>, vector<1x256xf32>
    %344 = vector.broadcast %342 : f32 to vector<1x256xf32>
    %345 = arith.mulf %344, %343 : vector<1x256xf32>
    %346 = arith.addf %341, %345 : vector<1x256xf32>
    %c53 = arith.constant 53 : index
    %347 = memref.load %arg3[%c53] : memref<98xf32, #tpu.memory_space<smem>>
    %c1_139 = arith.constant 1 : index
    %c4_140 = arith.constant 4 : index
    %348 = vector.load %arg6[%c1_139, %c4_140] : memref<2x358xf32, #tpu.memory_space<vmem>>, vector<1x256xf32>
    %349 = vector.broadcast %347 : f32 to vector<1x256xf32>
    %350 = arith.mulf %349, %348 : vector<1x256xf32>
    %351 = arith.addf %346, %350 : vector<1x256xf32>
    %c60 = arith.constant 60 : index
    %352 = memref.load %arg3[%c60] : memref<98xf32, #tpu.memory_space<smem>>
    %c1_141 = arith.constant 1 : index
    %c20_142 = arith.constant 20 : index
    %353 = vector.load %arg6[%c1_141, %c20_142] : memref<2x358xf32, #tpu.memory_space<vmem>>, vector<1x256xf32>
    %354 = vector.broadcast %352 : f32 to vector<1x256xf32>
    %355 = arith.mulf %354, %353 : vector<1x256xf32>
    %356 = arith.addf %351, %355 : vector<1x256xf32>
    %c67_143 = arith.constant 67 : index
    %357 = memref.load %arg3[%c67_143] : memref<98xf32, #tpu.memory_space<smem>>
    %c1_144 = arith.constant 1 : index
    %c36_145 = arith.constant 36 : index
    %358 = vector.load %arg6[%c1_144, %c36_145] : memref<2x358xf32, #tpu.memory_space<vmem>>, vector<1x256xf32>
    %359 = vector.broadcast %357 : f32 to vector<1x256xf32>
    %360 = arith.mulf %359, %358 : vector<1x256xf32>
    %361 = arith.addf %356, %360 : vector<1x256xf32>
    %c74 = arith.constant 74 : index
    %362 = memref.load %arg3[%c74] : memref<98xf32, #tpu.memory_space<smem>>
    %c1_146 = arith.constant 1 : index
    %c52_147 = arith.constant 52 : index
    %363 = vector.load %arg6[%c1_146, %c52_147] : memref<2x358xf32, #tpu.memory_space<vmem>>, vector<1x256xf32>
    %364 = vector.broadcast %362 : f32 to vector<1x256xf32>
    %365 = arith.mulf %364, %363 : vector<1x256xf32>
    %366 = arith.addf %361, %365 : vector<1x256xf32>
    %c81_148 = arith.constant 81 : index
    %367 = memref.load %arg3[%c81_148] : memref<98xf32, #tpu.memory_space<smem>>
    %c1_149 = arith.constant 1 : index
    %c68_150 = arith.constant 68 : index
    %368 = vector.load %arg6[%c1_149, %c68_150] : memref<2x358xf32, #tpu.memory_space<vmem>>, vector<1x256xf32>
    %369 = vector.broadcast %367 : f32 to vector<1x256xf32>
    %370 = arith.mulf %369, %368 : vector<1x256xf32>
    %371 = arith.addf %366, %370 : vector<1x256xf32>
    %c88 = arith.constant 88 : index
    %372 = memref.load %arg3[%c88] : memref<98xf32, #tpu.memory_space<smem>>
    %c1_151 = arith.constant 1 : index
    %c84_152 = arith.constant 84 : index
    %373 = vector.load %arg6[%c1_151, %c84_152] : memref<2x358xf32, #tpu.memory_space<vmem>>, vector<1x256xf32>
    %374 = vector.broadcast %372 : f32 to vector<1x256xf32>
    %375 = arith.mulf %374, %373 : vector<1x256xf32>
    %376 = arith.addf %371, %375 : vector<1x256xf32>
    %c95 = arith.constant 95 : index
    %377 = memref.load %arg3[%c95] : memref<98xf32, #tpu.memory_space<smem>>
    %c1_153 = arith.constant 1 : index
    %c100_154 = arith.constant 100 : index
    %378 = vector.load %arg6[%c1_153, %c100_154] : memref<2x358xf32, #tpu.memory_space<vmem>>, vector<1x256xf32>
    %379 = vector.broadcast %377 : f32 to vector<1x256xf32>
    %380 = arith.mulf %379, %378 : vector<1x256xf32>
    %381 = arith.addf %376, %380 : vector<1x256xf32>
    %c4_155 = arith.constant 4 : index
    %c0_156 = arith.constant 0 : index
    %382 = vector.load %arg1[%c4_155, %c0_156] : memref<7x256xf32, #tpu.memory_space<vmem>>, vector<1x256xf32>
    %383 = arith.mulf %382, %381 : vector<1x256xf32>
    %384 = arith.addf %310, %383 : vector<1x256xf32>
    %cst_157 = arith.constant 0.000000e+00 : f32
    %385 = vector.broadcast %cst_157 : f32 to vector<1x256xf32>
    %c5 = arith.constant 5 : index
    %386 = memref.load %arg3[%c5] : memref<98xf32, #tpu.memory_space<smem>>
    %c0_158 = arith.constant 0 : index
    %c5_159 = arith.constant 5 : index
    %387 = vector.load %arg6[%c0_158, %c5_159] : memref<2x358xf32, #tpu.memory_space<vmem>>, vector<1x256xf32>
    %388 = vector.broadcast %386 : f32 to vector<1x256xf32>
    %389 = arith.mulf %388, %387 : vector<1x256xf32>
    %390 = arith.addf %385, %389 : vector<1x256xf32>
    %c12 = arith.constant 12 : index
    %391 = memref.load %arg3[%c12] : memref<98xf32, #tpu.memory_space<smem>>
    %c0_160 = arith.constant 0 : index
    %c21_161 = arith.constant 21 : index
    %392 = vector.load %arg6[%c0_160, %c21_161] : memref<2x358xf32, #tpu.memory_space<vmem>>, vector<1x256xf32>
    %393 = vector.broadcast %391 : f32 to vector<1x256xf32>
    %394 = arith.mulf %393, %392 : vector<1x256xf32>
    %395 = arith.addf %390, %394 : vector<1x256xf32>
    %c19_162 = arith.constant 19 : index
    %396 = memref.load %arg3[%c19_162] : memref<98xf32, #tpu.memory_space<smem>>
    %c0_163 = arith.constant 0 : index
    %c37_164 = arith.constant 37 : index
    %397 = vector.load %arg6[%c0_163, %c37_164] : memref<2x358xf32, #tpu.memory_space<vmem>>, vector<1x256xf32>
    %398 = vector.broadcast %396 : f32 to vector<1x256xf32>
    %399 = arith.mulf %398, %397 : vector<1x256xf32>
    %400 = arith.addf %395, %399 : vector<1x256xf32>
    %c26 = arith.constant 26 : index
    %401 = memref.load %arg3[%c26] : memref<98xf32, #tpu.memory_space<smem>>
    %c0_165 = arith.constant 0 : index
    %c53_166 = arith.constant 53 : index
    %402 = vector.load %arg6[%c0_165, %c53_166] : memref<2x358xf32, #tpu.memory_space<vmem>>, vector<1x256xf32>
    %403 = vector.broadcast %401 : f32 to vector<1x256xf32>
    %404 = arith.mulf %403, %402 : vector<1x256xf32>
    %405 = arith.addf %400, %404 : vector<1x256xf32>
    %c33_167 = arith.constant 33 : index
    %406 = memref.load %arg3[%c33_167] : memref<98xf32, #tpu.memory_space<smem>>
    %c0_168 = arith.constant 0 : index
    %c69 = arith.constant 69 : index
    %407 = vector.load %arg6[%c0_168, %c69] : memref<2x358xf32, #tpu.memory_space<vmem>>, vector<1x256xf32>
    %408 = vector.broadcast %406 : f32 to vector<1x256xf32>
    %409 = arith.mulf %408, %407 : vector<1x256xf32>
    %410 = arith.addf %405, %409 : vector<1x256xf32>
    %c40 = arith.constant 40 : index
    %411 = memref.load %arg3[%c40] : memref<98xf32, #tpu.memory_space<smem>>
    %c0_169 = arith.constant 0 : index
    %c85_170 = arith.constant 85 : index
    %412 = vector.load %arg6[%c0_169, %c85_170] : memref<2x358xf32, #tpu.memory_space<vmem>>, vector<1x256xf32>
    %413 = vector.broadcast %411 : f32 to vector<1x256xf32>
    %414 = arith.mulf %413, %412 : vector<1x256xf32>
    %415 = arith.addf %410, %414 : vector<1x256xf32>
    %c47 = arith.constant 47 : index
    %416 = memref.load %arg3[%c47] : memref<98xf32, #tpu.memory_space<smem>>
    %c0_171 = arith.constant 0 : index
    %c101 = arith.constant 101 : index
    %417 = vector.load %arg6[%c0_171, %c101] : memref<2x358xf32, #tpu.memory_space<vmem>>, vector<1x256xf32>
    %418 = vector.broadcast %416 : f32 to vector<1x256xf32>
    %419 = arith.mulf %418, %417 : vector<1x256xf32>
    %420 = arith.addf %415, %419 : vector<1x256xf32>
    %c54 = arith.constant 54 : index
    %421 = memref.load %arg3[%c54] : memref<98xf32, #tpu.memory_space<smem>>
    %c1_172 = arith.constant 1 : index
    %c5_173 = arith.constant 5 : index
    %422 = vector.load %arg6[%c1_172, %c5_173] : memref<2x358xf32, #tpu.memory_space<vmem>>, vector<1x256xf32>
    %423 = vector.broadcast %421 : f32 to vector<1x256xf32>
    %424 = arith.mulf %423, %422 : vector<1x256xf32>
    %425 = arith.addf %420, %424 : vector<1x256xf32>
    %c61 = arith.constant 61 : index
    %426 = memref.load %arg3[%c61] : memref<98xf32, #tpu.memory_space<smem>>
    %c1_174 = arith.constant 1 : index
    %c21_175 = arith.constant 21 : index
    %427 = vector.load %arg6[%c1_174, %c21_175] : memref<2x358xf32, #tpu.memory_space<vmem>>, vector<1x256xf32>
    %428 = vector.broadcast %426 : f32 to vector<1x256xf32>
    %429 = arith.mulf %428, %427 : vector<1x256xf32>
    %430 = arith.addf %425, %429 : vector<1x256xf32>
    %c68_176 = arith.constant 68 : index
    %431 = memref.load %arg3[%c68_176] : memref<98xf32, #tpu.memory_space<smem>>
    %c1_177 = arith.constant 1 : index
    %c37_178 = arith.constant 37 : index
    %432 = vector.load %arg6[%c1_177, %c37_178] : memref<2x358xf32, #tpu.memory_space<vmem>>, vector<1x256xf32>
    %433 = vector.broadcast %431 : f32 to vector<1x256xf32>
    %434 = arith.mulf %433, %432 : vector<1x256xf32>
    %435 = arith.addf %430, %434 : vector<1x256xf32>
    %c75 = arith.constant 75 : index
    %436 = memref.load %arg3[%c75] : memref<98xf32, #tpu.memory_space<smem>>
    %c1_179 = arith.constant 1 : index
    %c53_180 = arith.constant 53 : index
    %437 = vector.load %arg6[%c1_179, %c53_180] : memref<2x358xf32, #tpu.memory_space<vmem>>, vector<1x256xf32>
    %438 = vector.broadcast %436 : f32 to vector<1x256xf32>
    %439 = arith.mulf %438, %437 : vector<1x256xf32>
    %440 = arith.addf %435, %439 : vector<1x256xf32>
    %c82_181 = arith.constant 82 : index
    %441 = memref.load %arg3[%c82_181] : memref<98xf32, #tpu.memory_space<smem>>
    %c1_182 = arith.constant 1 : index
    %c69_183 = arith.constant 69 : index
    %442 = vector.load %arg6[%c1_182, %c69_183] : memref<2x358xf32, #tpu.memory_space<vmem>>, vector<1x256xf32>
    %443 = vector.broadcast %441 : f32 to vector<1x256xf32>
    %444 = arith.mulf %443, %442 : vector<1x256xf32>
    %445 = arith.addf %440, %444 : vector<1x256xf32>
    %c89 = arith.constant 89 : index
    %446 = memref.load %arg3[%c89] : memref<98xf32, #tpu.memory_space<smem>>
    %c1_184 = arith.constant 1 : index
    %c85_185 = arith.constant 85 : index
    %447 = vector.load %arg6[%c1_184, %c85_185] : memref<2x358xf32, #tpu.memory_space<vmem>>, vector<1x256xf32>
    %448 = vector.broadcast %446 : f32 to vector<1x256xf32>
    %449 = arith.mulf %448, %447 : vector<1x256xf32>
    %450 = arith.addf %445, %449 : vector<1x256xf32>
    %c96_186 = arith.constant 96 : index
    %451 = memref.load %arg3[%c96_186] : memref<98xf32, #tpu.memory_space<smem>>
    %c1_187 = arith.constant 1 : index
    %c101_188 = arith.constant 101 : index
    %452 = vector.load %arg6[%c1_187, %c101_188] : memref<2x358xf32, #tpu.memory_space<vmem>>, vector<1x256xf32>
    %453 = vector.broadcast %451 : f32 to vector<1x256xf32>
    %454 = arith.mulf %453, %452 : vector<1x256xf32>
    %455 = arith.addf %450, %454 : vector<1x256xf32>
    %c5_189 = arith.constant 5 : index
    %c0_190 = arith.constant 0 : index
    %456 = vector.load %arg1[%c5_189, %c0_190] : memref<7x256xf32, #tpu.memory_space<vmem>>, vector<1x256xf32>
    %457 = arith.mulf %456, %455 : vector<1x256xf32>
    %458 = arith.addf %384, %457 : vector<1x256xf32>
    %cst_191 = arith.constant 0.000000e+00 : f32
    %459 = vector.broadcast %cst_191 : f32 to vector<1x256xf32>
    %c6 = arith.constant 6 : index
    %460 = memref.load %arg3[%c6] : memref<98xf32, #tpu.memory_space<smem>>
    %c0_192 = arith.constant 0 : index
    %c6_193 = arith.constant 6 : index
    %461 = vector.load %arg6[%c0_192, %c6_193] : memref<2x358xf32, #tpu.memory_space<vmem>>, vector<1x256xf32>
    %462 = vector.broadcast %460 : f32 to vector<1x256xf32>
    %463 = arith.mulf %462, %461 : vector<1x256xf32>
    %464 = arith.addf %459, %463 : vector<1x256xf32>
    %c13 = arith.constant 13 : index
    %465 = memref.load %arg3[%c13] : memref<98xf32, #tpu.memory_space<smem>>
    %c0_194 = arith.constant 0 : index
    %c22_195 = arith.constant 22 : index
    %466 = vector.load %arg6[%c0_194, %c22_195] : memref<2x358xf32, #tpu.memory_space<vmem>>, vector<1x256xf32>
    %467 = vector.broadcast %465 : f32 to vector<1x256xf32>
    %468 = arith.mulf %467, %466 : vector<1x256xf32>
    %469 = arith.addf %464, %468 : vector<1x256xf32>
    %c20_196 = arith.constant 20 : index
    %470 = memref.load %arg3[%c20_196] : memref<98xf32, #tpu.memory_space<smem>>
    %c0_197 = arith.constant 0 : index
    %c38_198 = arith.constant 38 : index
    %471 = vector.load %arg6[%c0_197, %c38_198] : memref<2x358xf32, #tpu.memory_space<vmem>>, vector<1x256xf32>
    %472 = vector.broadcast %470 : f32 to vector<1x256xf32>
    %473 = arith.mulf %472, %471 : vector<1x256xf32>
    %474 = arith.addf %469, %473 : vector<1x256xf32>
    %c27 = arith.constant 27 : index
    %475 = memref.load %arg3[%c27] : memref<98xf32, #tpu.memory_space<smem>>
    %c0_199 = arith.constant 0 : index
    %c54_200 = arith.constant 54 : index
    %476 = vector.load %arg6[%c0_199, %c54_200] : memref<2x358xf32, #tpu.memory_space<vmem>>, vector<1x256xf32>
    %477 = vector.broadcast %475 : f32 to vector<1x256xf32>
    %478 = arith.mulf %477, %476 : vector<1x256xf32>
    %479 = arith.addf %474, %478 : vector<1x256xf32>
    %c34_201 = arith.constant 34 : index
    %480 = memref.load %arg3[%c34_201] : memref<98xf32, #tpu.memory_space<smem>>
    %c0_202 = arith.constant 0 : index
    %c70_203 = arith.constant 70 : index
    %481 = vector.load %arg6[%c0_202, %c70_203] : memref<2x358xf32, #tpu.memory_space<vmem>>, vector<1x256xf32>
    %482 = vector.broadcast %480 : f32 to vector<1x256xf32>
    %483 = arith.mulf %482, %481 : vector<1x256xf32>
    %484 = arith.addf %479, %483 : vector<1x256xf32>
    %c41 = arith.constant 41 : index
    %485 = memref.load %arg3[%c41] : memref<98xf32, #tpu.memory_space<smem>>
    %c0_204 = arith.constant 0 : index
    %c86_205 = arith.constant 86 : index
    %486 = vector.load %arg6[%c0_204, %c86_205] : memref<2x358xf32, #tpu.memory_space<vmem>>, vector<1x256xf32>
    %487 = vector.broadcast %485 : f32 to vector<1x256xf32>
    %488 = arith.mulf %487, %486 : vector<1x256xf32>
    %489 = arith.addf %484, %488 : vector<1x256xf32>
    %c48_206 = arith.constant 48 : index
    %490 = memref.load %arg3[%c48_206] : memref<98xf32, #tpu.memory_space<smem>>
    %c0_207 = arith.constant 0 : index
    %c102 = arith.constant 102 : index
    %491 = vector.load %arg6[%c0_207, %c102] : memref<2x358xf32, #tpu.memory_space<vmem>>, vector<1x256xf32>
    %492 = vector.broadcast %490 : f32 to vector<1x256xf32>
    %493 = arith.mulf %492, %491 : vector<1x256xf32>
    %494 = arith.addf %489, %493 : vector<1x256xf32>
    %c55 = arith.constant 55 : index
    %495 = memref.load %arg3[%c55] : memref<98xf32, #tpu.memory_space<smem>>
    %c1_208 = arith.constant 1 : index
    %c6_209 = arith.constant 6 : index
    %496 = vector.load %arg6[%c1_208, %c6_209] : memref<2x358xf32, #tpu.memory_space<vmem>>, vector<1x256xf32>
    %497 = vector.broadcast %495 : f32 to vector<1x256xf32>
    %498 = arith.mulf %497, %496 : vector<1x256xf32>
    %499 = arith.addf %494, %498 : vector<1x256xf32>
    %c62 = arith.constant 62 : index
    %500 = memref.load %arg3[%c62] : memref<98xf32, #tpu.memory_space<smem>>
    %c1_210 = arith.constant 1 : index
    %c22_211 = arith.constant 22 : index
    %501 = vector.load %arg6[%c1_210, %c22_211] : memref<2x358xf32, #tpu.memory_space<vmem>>, vector<1x256xf32>
    %502 = vector.broadcast %500 : f32 to vector<1x256xf32>
    %503 = arith.mulf %502, %501 : vector<1x256xf32>
    %504 = arith.addf %499, %503 : vector<1x256xf32>
    %c69_212 = arith.constant 69 : index
    %505 = memref.load %arg3[%c69_212] : memref<98xf32, #tpu.memory_space<smem>>
    %c1_213 = arith.constant 1 : index
    %c38_214 = arith.constant 38 : index
    %506 = vector.load %arg6[%c1_213, %c38_214] : memref<2x358xf32, #tpu.memory_space<vmem>>, vector<1x256xf32>
    %507 = vector.broadcast %505 : f32 to vector<1x256xf32>
    %508 = arith.mulf %507, %506 : vector<1x256xf32>
    %509 = arith.addf %504, %508 : vector<1x256xf32>
    %c76 = arith.constant 76 : index
    %510 = memref.load %arg3[%c76] : memref<98xf32, #tpu.memory_space<smem>>
    %c1_215 = arith.constant 1 : index
    %c54_216 = arith.constant 54 : index
    %511 = vector.load %arg6[%c1_215, %c54_216] : memref<2x358xf32, #tpu.memory_space<vmem>>, vector<1x256xf32>
    %512 = vector.broadcast %510 : f32 to vector<1x256xf32>
    %513 = arith.mulf %512, %511 : vector<1x256xf32>
    %514 = arith.addf %509, %513 : vector<1x256xf32>
    %c83_217 = arith.constant 83 : index
    %515 = memref.load %arg3[%c83_217] : memref<98xf32, #tpu.memory_space<smem>>
    %c1_218 = arith.constant 1 : index
    %c70_219 = arith.constant 70 : index
    %516 = vector.load %arg6[%c1_218, %c70_219] : memref<2x358xf32, #tpu.memory_space<vmem>>, vector<1x256xf32>
    %517 = vector.broadcast %515 : f32 to vector<1x256xf32>
    %518 = arith.mulf %517, %516 : vector<1x256xf32>
    %519 = arith.addf %514, %518 : vector<1x256xf32>
    %c90 = arith.constant 90 : index
    %520 = memref.load %arg3[%c90] : memref<98xf32, #tpu.memory_space<smem>>
    %c1_220 = arith.constant 1 : index
    %c86_221 = arith.constant 86 : index
    %521 = vector.load %arg6[%c1_220, %c86_221] : memref<2x358xf32, #tpu.memory_space<vmem>>, vector<1x256xf32>
    %522 = vector.broadcast %520 : f32 to vector<1x256xf32>
    %523 = arith.mulf %522, %521 : vector<1x256xf32>
    %524 = arith.addf %519, %523 : vector<1x256xf32>
    %c97_222 = arith.constant 97 : index
    %525 = memref.load %arg3[%c97_222] : memref<98xf32, #tpu.memory_space<smem>>
    %c1_223 = arith.constant 1 : index
    %c102_224 = arith.constant 102 : index
    %526 = vector.load %arg6[%c1_223, %c102_224] : memref<2x358xf32, #tpu.memory_space<vmem>>, vector<1x256xf32>
    %527 = vector.broadcast %525 : f32 to vector<1x256xf32>
    %528 = arith.mulf %527, %526 : vector<1x256xf32>
    %529 = arith.addf %524, %528 : vector<1x256xf32>
    %c6_225 = arith.constant 6 : index
    %c0_226 = arith.constant 0 : index
    %530 = vector.load %arg1[%c6_225, %c0_226] : memref<7x256xf32, #tpu.memory_space<vmem>>, vector<1x256xf32>
    %531 = arith.mulf %530, %529 : vector<1x256xf32>
    %532 = arith.addf %458, %531 : vector<1x256xf32>
    %c0_227 = arith.constant 0 : index
    %533 = memref.load %arg4[%c0_227] : memref<2xf32, #tpu.memory_space<smem>>
    %534 = vector.broadcast %533 : f32 to vector<1x256xf32>
    %535 = arith.mulf %532, %534 : vector<1x256xf32>
    %c1_228 = arith.constant 1 : index
    %536 = memref.load %arg4[%c1_228] : memref<2xf32, #tpu.memory_space<smem>>
    %537 = vector.broadcast %536 : f32 to vector<1x256xf32>
    %538 = arith.addf %535, %537 : vector<1x256xf32>
    %539 = arith.negf %538 : vector<1x256xf32>
    %540 = math.exp %539 : vector<1x256xf32>
    %cst_229 = arith.constant 1.000000e+00 : f32
    %541 = vector.broadcast %cst_229 : f32 to vector<1x256xf32>
    %542 = arith.addf %541, %540 : vector<1x256xf32>
    %543 = arith.divf %541, %542 : vector<1x256xf32>
    %c0_230 = arith.constant 0 : index
    %c0_231 = arith.constant 0 : index
    %c0_232 = arith.constant 0 : index
    %544 = vector.load %arg2[%c0_230, %c0_231, %c0_232] : memref<1x4x256xf32, #tpu.memory_space<vmem>>, vector<1x4x256xf32>
    %545 = vector.shape_cast %544 : vector<1x4x256xf32> to vector<4x256xf32>
    %546 = vector.broadcast %543 : vector<1x256xf32> to vector<4x256xf32>
    %547 = arith.mulf %545, %546 : vector<4x256xf32>
    %c0_233 = arith.constant 0 : index
    %c0_234 = arith.constant 0 : index
    %c0_235 = arith.constant 0 : index
    %548 = vector.load %arg5[%c0_233, %c0_234, %c0_235] : memref<1x4x256xf32, #tpu.memory_space<vmem>>, vector<1x4x256xf32>
    %549 = vector.shape_cast %548 : vector<1x4x256xf32> to vector<4x256xf32>
    %550 = vector.shape_cast %547 : vector<4x256xf32> to vector<1x4x256xf32>
    tpu.vector_store %arg5[%c0_233, %c0_234, %c0_235], %550 {strides = array<i32>} : memref<1x4x256xf32, #tpu.memory_space<vmem>>, vector<1x4x256xf32>,
    return
  }
  func.func @transform_0(%arg0: i32) -> (i32, i32) {
    %c0_i32 = arith.constant 0 : i32
    %c0_i32_0 = arith.constant 0 : i32
    %c0_i32_1 = arith.constant 0 : i32
    return %c0_i32, %c0_i32_0 : i32, i32
  }
  func.func @transform_1(%arg0: i32) -> (i32, i32, i32) {
    %c0_i32 = arith.constant 0 : i32
    %c0_i32_0 = arith.constant 0 : i32
    %c0_i32_1 = arith.constant 0 : i32
    return %arg0, %c0_i32, %c0_i32_0 : i32, i32, i32
  }
  func.func @transform_2(%arg0: i32) -> i32 {
    %c0_i32 = arith.constant 0 : i32
    %c0_i32_0 = arith.constant 0 : i32
    return %c0_i32 : i32
  }
  func.func @transform_3(%arg0: i32) -> i32 {
    %c0_i32 = arith.constant 0 : i32
    %c0_i32_0 = arith.constant 0 : i32
    return %c0_i32 : i32
  }
  func.func @transform_4(%arg0: i32) -> (i32, i32, i32) {
    %c0_i32 = arith.constant 0 : i32
    %c0_i32_0 = arith.constant 0 : i32
    %c0_i32_1 = arith.constant 0 : i32
    return %arg0, %c0_i32, %c0_i32_0 : i32, i32, i32
  }
}

</mosaic_0001>

<llo_original>
// kernel: tpu_custom_call.1
$region0: #{tpu_custom_call.1}
  #allocation0 [shape = 'u32[]', space=smem, size = 0x4, offset = 0x4, fixed_abs, tag = 'smem constant byte address 0x4 - core index']
  #allocation1 [shape = 'u32[144,128]{1,0:T(1,128)}', space=vmem, size = 0x12000, scoped, tag = 'internal scratch']
  #allocation2 [shape = 'f32[2,358]{1,0:T(2,128)}', space=vmem, size = 0xc00, scoped, tag = 'scratch operand']
  %s0 = inlined_call_operand.hbm [shape: f32[7,256], index: 0, kind: input, shape index: {}]
  %s1 = inlined_call_operand.hbm [shape: f32[2,4,256], index: 1, kind: input, shape index: {}]
  %s2 = inlined_call_operand.vmem [shape: f32[98], index: 2, kind: input, shape index: {}]
  %s3 = inlined_call_operand.vmem [shape: f32[2], index: 3, kind: input, shape index: {}]
  %s4 = inlined_call_operand.hbm [shape: f32[2,4,256], index: 4, kind: output, shape index: {}]
  %s5 = sld [smem:[#allocation0]]
  $region65: #{tpu_custom_call.1} parent=0
    _
  %s7 = ssub.s32 1, %s5
  %s8 = scalar_select 0, %s7, %s5
  $region1: #{tpu_custom_call.1} parent=0
    #allocation3 [shape = 'u8[8192]{0}', space=vmem, size = 0x2000, scoped, tag = 'input window, operand 0, single buffered']
    #allocation4 [shape = 's32[2]{0}', space=sflag, size = 0x8, scoped, tag = 'scoped memory for tpu_custom_call.1']
    #allocation5 [shape = 's32[2]{0}', space=sflag, size = 0x8, scoped, tag = 'scoped memory for tpu_custom_call.1']
    #allocation6 [shape = 's32[2]{0}', space=sflag, size = 0x8, scoped, tag = 'scoped memory for tpu_custom_call.1']
    #allocation7 [shape = 'u8[8192]{0}', space=vmem, size = 0x2000, scoped, tag = 'input window, operand 1']
    #allocation8 [shape = 's32[2]{0}', space=sflag, size = 0x8, scoped, tag = 'scoped memory for tpu_custom_call.1']
    #allocation9 [shape = 'u8[512]{0}', space=smem, size = 0x200, scoped, tag = 'input window, operand 2, single buffered']
    #allocation10 [shape = 'u8[512]{0}', space=smem, size = 0x200, scoped, tag = 'input window, operand 3, single buffered']
    #allocation11 [shape = 's32[1]{0}', space=sflag, size = 0x4, scoped, tag = 'scoped memory for tpu_custom_call.1']
    #allocation12 [shape = 'u8[8192]{0}', space=vmem, size = 0x2000, scoped, tag = 'output window, operand 0']
    %9 = vsyncpa [#allocation4], 0
    %10 = vsyncpa [#allocation8], 0
    %s11 = scalar_lea.sflag [#allocation8], 1
    %12 = vsyncpa %s11, 0
    %13 = vsyncpa [#allocation6], 0
    %14 = vsyncpa [#allocation11], 0
    %15 = vsyncpa [#allocation5], 0
    %s16 = scalar_lea.sflag [#allocation5], 1
    %17 = vsyncpa %s16, 0
    loop: start=0, step=1, limit=4
    $region2: #{tpu_custom_call.1} parent=1 // loop_pre_header
      _
    $region3: #{tpu_custom_call.1} parent=1 // loop_header
      %s19 = sphi 0, %s23
      %p20 = scmp.ge.s32.totalorder %s19, 4
      %s27 = sphi 0, %s27
      %s29 = sphi 0, %s27
      %s30 = sphi 0, %s29
      %s44 = sphi 0, %s30
      %s50 = sphi 0, %s52
      %s53 = sphi 0, %s50
      %s54 = sphi 0, %s53
      %s70 = sphi 0, %s54
      %s74 = sphi 0, %s74
      %s76 = sphi 0, %s74
      %s77 = sphi 0, %s76
      %s91 = sphi 0, %s77
      %s95 = sphi 0, %s95
      %s97 = sphi 0, %s95
      %s98 = sphi 0, %s97
      %s112 = sphi 0, %s98
      %s118 = sphi 0, %s120
      %s121 = sphi 0, %s118
      %s122 = sphi 0, %s121
      %s138 = sphi 0, %s122
    $region4: #{tpu_custom_call.1} parent=1 // loop_header_branch
      %22 = sbr.rel (%p20) target = $region8
    $region5: #{tpu_custom_call.1} parent=1 // loop_body
      %s24 = ssub.s32 %s19, 1
      %s25 = ssub.s32 %s19, 2
      %s26 = sadd.s32 %s19, 1
      %s28 = sadd.s32 %s27, 1
      %p31 = scmp.eq.s32.totalorder %s19, 1
      %p32 = scmp.ne.s32.totalorder %s27, %s29
      %p33 = scmp.eq.s32.totalorder %s19, 0
      %p34 = por %p32, %p33
      %p35 = scmp.ne.s32.totalorder %s27, %s29
      %p36 = scmp.eq.s32.totalorder %s24, 1
      %p37 = por %p35, %p36
      %p38 = scmp.ne.s32.totalorder %s29, %s30
      %p39 = scmp.eq.s32.totalorder %s24, 0
      %p40 = por %p38, %p39
      %p41 = scmp.ne.s32.totalorder %s29, %s30
      %p42 = scmp.eq.s32.totalorder %s25, 1
      %p43 = por %p41, %p42
      %p45 = scmp.ne.s32.totalorder %s30, %s44
      %p46 = scmp.eq.s32.totalorder %s25, 0
      %p47 = por %p45, %p46
      %s48 = ssub.s32 %s19, %s26
      %p49 = scmp.eq.s32.totalorder %s48, 0
      %s51 = sadd.s32 %s50, 1
      %s52 = scalar_select %p49, %s50, %s51
      %p55 = pneg %p49
      %p56 = scmp.eq.s32.totalorder %s19, 1
      %p57 = por %p55, %p56
      %p58 = scmp.ne.s32.totalorder %s50, %s53
      %p59 = scmp.eq.s32.totalorder %s19, 0
      %p60 = por %p58, %p59
      %p61 = scmp.ne.s32.totalorder %s50, %s53
      %p62 = scmp.eq.s32.totalorder %s24, 1
      %p63 = por %p61, %p62
      %p64 = scmp.ne.s32.totalorder %s53, %s54
      %p65 = scmp.eq.s32.totalorder %s24, 0
      %p66 = por %p64, %p65
      %p67 = scmp.ne.s32.totalorder %s53, %s54
      %p68 = scmp.eq.s32.totalorder %s25, 1
      %p69 = por %p67, %p68
      %p71 = scmp.ne.s32.totalorder %s54, %s70
      %p72 = scmp.eq.s32.totalorder %s25, 0
      %p73 = por %p71, %p72
      %s75 = sadd.s32 %s74, 1
      %p78 = scmp.eq.s32.totalorder %s19, 1
      %p79 = scmp.ne.s32.totalorder %s74, %s76
      %p80 = scmp.eq.s32.totalorder %s19, 0
      %p81 = por %p79, %p80
      %p82 = scmp.ne.s32.totalorder %s74, %s76
      %p83 = scmp.eq.s32.totalorder %s24, 1
      %p84 = por %p82, %p83
      %p85 = scmp.ne.s32.totalorder %s76, %s77
      %p86 = scmp.eq.s32.totalorder %s24, 0
      %p87 = por %p85, %p86
      %p88 = scmp.ne.s32.totalorder %s76, %s77
      %p89 = scmp.eq.s32.totalorder %s25, 1
      %p90 = por %p88, %p89
      %p92 = scmp.ne.s32.totalorder %s77, %s91
      %p93 = scmp.eq.s32.totalorder %s25, 0
      %p94 = por %p92, %p93
      %s96 = sadd.s32 %s95, 1
      %p99 = scmp.eq.s32.totalorder %s19, 1
      %p100 = scmp.ne.s32.totalorder %s95, %s97
      %p101 = scmp.eq.s32.totalorder %s19, 0
      %p102 = por %p100, %p101
      %p103 = scmp.ne.s32.totalorder %s95, %s97
      %p104 = scmp.eq.s32.totalorder %s24, 1
      %p105 = por %p103, %p104
      %p106 = scmp.ne.s32.totalorder %s97, %s98
      %p107 = scmp.eq.s32.totalorder %s24, 0
      %p108 = por %p106, %p107
      %p109 = scmp.ne.s32.totalorder %s97, %s98
      %p110 = scmp.eq.s32.totalorder %s25, 1
      %p111 = por %p109, %p110
      %p113 = scmp.ne.s32.totalorder %s98, %s112
      %p114 = scmp.eq.s32.totalorder %s25, 0
      %p115 = por %p113, %p114
      %s116 = ssub.s32 %s19, %s26
      %p117 = scmp.eq.s32.totalorder %s116, 0
      %s119 = sadd.s32 %s118, 1
      %s120 = scalar_select %p117, %s118, %s119
      %p123 = pneg %p117
      %p124 = scmp.eq.s32.totalorder %s19, 1
      %p125 = por %p123, %p124
      %p126 = scmp.ne.s32.totalorder %s118, %s121
      %p127 = scmp.eq.s32.totalorder %s19, 0
      %p128 = por %p126, %p127
      %p129 = scmp.ne.s32.totalorder %s118, %s121
      %p130 = scmp.eq.s32.totalorder %s24, 1
      %p131 = por %p129, %p130
      %p132 = scmp.ne.s32.totalorder %s121, %s122
      %p133 = scmp.eq.s32.totalorder %s24, 0
      %p134 = por %p132, %p133
      %p135 = scmp.ne.s32.totalorder %s121, %s122
      %p136 = scmp.eq.s32.totalorder %s25, 1
      %p137 = por %p135, %p136
      %p139 = scmp.ne.s32.totalorder %s122, %s138
      %p140 = scmp.eq.s32.totalorder %s25, 0
      %p141 = por %p139, %p140
      %p142 = scmp.le.s32.totalorder 1, %s19
      %p143 = scmp.lt.s32.totalorder %s19, 3
      %p144 = pnand %p142, %p143
      %p145 = pneg %p144
      // Predicated region
      $region9: #{tpu_custom_call.1} parent=5 // pred_check
        _
      $region10: #{tpu_custom_call.1} parent=5 // pred_check_branch
        %147 = sbr.rel (%p144) target = $region12
      $region11: #{tpu_custom_call.1} parent=5 // pred_region
        %s148 = ssub.s32 %s19, 1
        // Predicated region
        $region13: #{tpu_custom_call.1} parent=11 // pred_check
          %p149 = pneg %p40
        $region14: #{tpu_custom_call.1} parent=11 // pred_check_branch
          %151 = sbr.rel (%p149) target = $region16
        $region15: #{tpu_custom_call.1} parent=11 // pred_region
          %s153 = ssub.s32 256, 256
          %154 = vsyncadd [#allocation4], %s153
          %s156 = sshll.u32 [#allocation3], 4
          %s157 = int_to_ptr.vmem [resolvable:$true] %s156
          %159 = dma.hbm_to_vmem [thread:$0]  %s0, 256, %s157, [#allocation4]
        $region16: #{tpu_custom_call.1} parent=11 // pred_fallthru
          _
        // Predicated region
        $region17: #{tpu_custom_call.1} parent=11 // pred_check
          %p160 = pneg %p87
        $region18: #{tpu_custom_call.1} parent=11 // pred_check_branch
          %162 = sbr.rel (%p160) target = $region20
        $region19: #{tpu_custom_call.1} parent=11 // pred_region
          %s164 = ssub.s32 16, 16
          %165 = vsyncadd [#allocation6], %s164
          %s167 = sshll.u32 %s2, 4
          %s168 = int_to_ptr.vmem [resolvable:$true] %s167
          %170 = dma.vmem_to_smem %s168, 16, [#allocation9], [#allocation6]
        $region20: #{tpu_custom_call.1} parent=11 // pred_fallthru
          _
        // Predicated region
        $region21: #{tpu_custom_call.1} parent=11 // pred_check
          %p171 = pneg %p108
        $region22: #{tpu_custom_call.1} parent=11 // pred_check_branch
          %173 = sbr.rel (%p171) target = $region24
        $region23: #{tpu_custom_call.1} parent=11 // pred_region
          %s175 = ssub.s32 16, 16
          %176 = vsyncadd [#allocation11], %s175
          %s178 = sshll.u32 %s3, 4
          %s179 = int_to_ptr.vmem [resolvable:$true] %s178
          %181 = dma.vmem_to_smem %s179, 16, [#allocation10], [#allocation11]
        $region24: #{tpu_custom_call.1} parent=11 // pred_fallthru
          _
      $region12: #{tpu_custom_call.1} parent=5 // pred_fallthru
        _
      %p182 = scmp.lt.s32.totalorder %s19, 2
      // Predicated region
      $region25: #{tpu_custom_call.1} parent=5 // pred_check
        %p183 = pneg %p182
      $region26: #{tpu_custom_call.1} parent=5 // pred_check_branch
        %185 = sbr.rel (%p183) target = $region28
      $region27: #{tpu_custom_call.1} parent=5 // pred_region
        // Predicated region
        $region29: #{tpu_custom_call.1} parent=27 // pred_check
          %p186 = pneg %p60
        $region30: #{tpu_custom_call.1} parent=27 // pred_check_branch
          %188 = sbr.rel (%p186) target = $region32
        $region31: #{tpu_custom_call.1} parent=27 // pred_region
          %s189 = sand.u32 %s50, 1
          %s190 = scalar_lea.sflag [#allocation8], %s189
          %s191 = sand.u32 %s50, 1
          %s192 = smul.addr %s191, 8
          %s193 = scalar_lea.vmem [#allocation7], %s192
          %s195 = ssub.s32 128, 128
          %196 = vsyncadd %s190, %s195
          %s197 = smul.addr %s19, 2
          %s198 = smul.addr %s197, 64
          %s199 = scalar_lea.hbm %s1, %s198
          %s201 = sshll.u32 %s193, 4
          %s202 = int_to_ptr.vmem [resolvable:$true] %s201
          %204 = dma.hbm_to_vmem [thread:$0]  %s199, 128, %s202, %s190
        $region32: #{tpu_custom_call.1} parent=27 // pred_fallthru
          _
      $region28: #{tpu_custom_call.1} parent=5 // pred_fallthru
        _
      %p205 = scmp.le.s32.totalorder 1, %s19
      %p206 = scmp.lt.s32.totalorder %s19, 3
      %p207 = pnand %p205, %p206
      %p208 = pneg %p207
      // Predicated region
      $region33: #{tpu_custom_call.1} parent=5 // pred_check
        _
      $region34: #{tpu_custom_call.1} parent=5 // pred_check_branch
        %210 = sbr.rel (%p207) target = $region36
      $region35: #{tpu_custom_call.1} parent=5 // pred_region
        %s211 = ssub.s32 %s19, 1
        // Predicated region
        $region37: #{tpu_custom_call.1} parent=35 // pred_check
          %p212 = pneg %p40
        $region38: #{tpu_custom_call.1} parent=35 // pred_check_branch
          %214 = sbr.rel (%p212) target = $region40
        $region39: #{tpu_custom_call.1} parent=35 // pred_region
          %215 = dma.done [#allocation4], 256
        $region40: #{tpu_custom_call.1} parent=35 // pred_fallthru
          _
        %s216 = sand.u32 %s53, 1
        %s217 = scalar_lea.sflag [#allocation8], %s216
        %s218 = sand.u32 %s53, 1
        %s219 = smul.addr %s218, 8
        %s220 = scalar_lea.vmem [#allocation7], %s219
        // Predicated region
        $region41: #{tpu_custom_call.1} parent=35 // pred_check
          %p221 = pneg %p66
        $region42: #{tpu_custom_call.1} parent=35 // pred_check_branch
          %223 = sbr.rel (%p221) target = $region44
        $region43: #{tpu_custom_call.1} parent=35 // pred_region
          %224 = dma.done %s217, 128
        $region44: #{tpu_custom_call.1} parent=35 // pred_fallthru
          _
        // Predicated region
        $region45: #{tpu_custom_call.1} parent=35 // pred_check
          %p225 = pneg %p87
        $region46: #{tpu_custom_call.1} parent=35 // pred_check_branch
          %227 = sbr.rel (%p225) target = $region48
        $region47: #{tpu_custom_call.1} parent=35 // pred_region
          %228 = dma.done [#allocation6], 16
        $region48: #{tpu_custom_call.1} parent=35 // pred_fallthru
          _
        // Predicated region
        $region49: #{tpu_custom_call.1} parent=35 // pred_check
          %p229 = pneg %p108
        $region50: #{tpu_custom_call.1} parent=35 // pred_check_branch
          %231 = sbr.rel (%p229) target = $region52
        $region51: #{tpu_custom_call.1} parent=35 // pred_region
          %232 = dma.done [#allocation11], 16
        $region52: #{tpu_custom_call.1} parent=35 // pred_fallthru
          _
        %233 = sfence
        %p234 = pneg %p40
        %p235 = pneg %p37
        %s236 = sand.u32 %s53, 1
        %s237 = scalar_lea.sflag [#allocation8], %s236
        %s238 = sand.u32 %s53, 1
        %s239 = smul.addr %s238, 8
        %s240 = scalar_lea.vmem [#allocation7], %s239
        %p241 = pneg %p66
        %p242 = pneg %p63
        %p243 = pneg %p87
        %p244 = pneg %p84
        %p245 = pneg %p108
        %p246 = pneg %p105
        %p247 = pneg %p134
        %p248 = pneg %p131
        %s249 = sand.u32 %s121, 1
        %s250 = scalar_lea.sflag [#allocation5], %s249
        %s251 = sand.u32 %s121, 1
        %s252 = smul.addr %s251, 8
        %s253 = scalar_lea.vmem [#allocation12], %s252
        %v254 = vld [vmem:[%s220] sm:$0xff]
        %v256 = vcombine.high %v254, %v254
        %vm258 = vcmask 1043456
        %v259 = vsel %vm258, %v254, -inf
        %v260 = vrot.slane %v259, 4
        %v261 = vmax.f32 %v259, %v260
        %v262 = vrot.slane %v261, 2
        %v263 = vmax.f32 %v261, %v262
        %v264 = vrot.slane %v263, 1
        %v265 = vmax.f32 %v263, %v264
        %v266 = vsel %vm258, %v256, -inf
        %v267 = vrot.slane %v266, 4
        %v268 = vmax.f32 %v266, %v267
        %v269 = vrot.slane %v268, 2
        %v270 = vmax.f32 %v268, %v269
        %v271 = vrot.slane %v270, 1
        %v272 = vmax.f32 %v270, %v271
        %v273 = vsel %vm258, %v254, 0.0
        %v274 = vrot.slane %v273, 4
        %v275 = vadd.f32 %v273, %v274
        %v276 = vrot.slane %v275, 2
        %v277 = vadd.f32 %v275, %v276
        %v278 = vrot.slane %v277, 1
        %v279 = vadd.f32 %v277, %v278
        %v280 = vsel %vm258, %v256, 0.0
        %v281 = vrot.slane %v280, 4
        %v282 = vadd.f32 %v280, %v281
        %v283 = vrot.slane %v282, 2
        %v284 = vadd.f32 %v282, %v283
        %v285 = vrot.slane %v284, 1
        %v286 = vadd.f32 %v284, %v285
        %v287 = vmul.f32 %v279, 0.25
        %v288 = vmul.f32 %v286, 0.25
        %vm289 = vcmask 410624
        %290 = vst.msk [vmem:[#allocation2] sm:$0x3] %vm289, 0.0
        %vm291 = vcmask 828824
        %292 = vst.msk [vmem:[#allocation2 + $0x4] sm:$0x3] %vm291, 0.0
        %v295 = vcombine.low %v265, %v272
        %v297 = vunpack.c.l.s4 1966171168
        %v298 = vunpack.c.0.s8 %v297
        %v299 = vlaneseq
        %v300 = vshrl.u32 %v299, 7
        %v301 = vsub.s32 %v298, %v300
        %v302 = vrot.slane %v295, %v301
        %v304 = vunpack.c.l.s4 1966171168
        %v305 = vunpack.c.0.s8 %v304
        %v306 = vlaneseq
        %v307 = vshrl.u32 %v306, 7
        %v308 = vsub.s32 %v305, %v307
        %v309 = vrot.slane %v302, %v308
        %310 = vrot.lane.b32.xlu0 %v309, 51
        %v311 = vpop.permute.xlu0 %310
        %v312 = vrot.slane %v311, 7
        %vm313 = vcmask 416768
        %v314 = vsel %vm313, %v312, %v311
        %v316 = vlaneseq
        %vm317 = vcmp.ge.s32.totalorder %v316, 51
        %vm318 = vcmp.lt.s32.totalorder %v316, 307
        %vm319 = vmand %vm317, %vm318
        %320 = vst.msk [vmem:[#allocation2] ss:$2 sm:$0x7] %vm319, %v314
        %v323 = vcombine.low %v287, %v288
        %v325 = vunpack.c.l.s4 1966171168
        %v326 = vunpack.c.0.s8 %v325
        %v327 = vlaneseq
        %v328 = vshrl.u32 %v327, 7
        %v329 = vsub.s32 %v326, %v328
        %v330 = vrot.slane %v323, %v329
        %v332 = vunpack.c.l.s4 1966171168
        %v333 = vunpack.c.0.s8 %v332
        %v334 = vlaneseq
        %v335 = vshrl.u32 %v334, 7
        %v336 = vsub.s32 %v333, %v335
        %v337 = vrot.slane %v330, %v336
        %338 = vrot.lane.b32.xlu0 %v337, 51
        %v339 = vpop.permute.xlu0 %338
        %v340 = vrot.slane %v339, 7
        %v341 = vsel %vm313, %v340, %v339
        %s343 = scalar_lea.vmem [#allocation2], 1
        %344 = vst.msk [vmem:[%s343] ss:$2 sm:$0x7] %vm319, %v341
        %s345 = sld [smem:[#allocation9]]
        %v346 = vld [vmem:[#allocation2] ss:$2 sm:$0x3]
        %v347 = vstv %s345
        %v348 = vmul.f32 %v347, %v346
        %v349 = vadd.f32 %v348, 0.0
        %s350 = sld [smem:[#allocation9 + $0x7]]
        %v351 = vld [vmem:[#allocation2] ss:$2 sm:$0x7]
        %v352 = vstv %s350
        %v353 = vmul.f32 %v352, %v351
        %355 = vrot.lane.b32.xlu0 %v353, 112
        %v356 = vpop.permute.xlu0 %355
        %v357 = vrot.slane %v356, 1
        %vm358 = vcmask 916480
        %v359 = vsel %vm358, %v356, %v357
        %v361 = vadd.f32 %v349, %v359
        %s362 = sld [smem:[#allocation9 + $0xe]]
        %v363 = vstv %s362
        %v364 = vmul.f32 %v363, %v351
        %366 = vrot.lane.b32.xlu0 %v364, 96
        %v367 = vpop.permute.xlu0 %366
        %v368 = vrot.slane %v367, 1
        %vm369 = vcmask 785408
        %v370 = vsel %vm369, %v367, %v368
        %v372 = vadd.f32 %v361, %v370
        %s373 = sld [smem:[#allocation9 + $0x15]]
        %v374 = vstv %s373
        %v375 = vmul.f32 %v374, %v351
        %377 = vrot.lane.b32.xlu0 %v375, 80
        %v378 = vpop.permute.xlu0 %377
        %v379 = vrot.slane %v378, 1
        %vm380 = vcmask 654336
        %v381 = vsel %vm380, %v378, %v379
        %v383 = vadd.f32 %v372, %v381
        %s384 = sld [smem:[#allocation9 + $0x1c]]
        %v385 = vstv %s384
        %v386 = vmul.f32 %v385, %v351
        %388 = vrot.lane.b32.xlu0 %v386, 64
        %v389 = vpop.permute.xlu0 %388
        %v390 = vrot.slane %v389, 1
        %vm391 = vcmask 523264
        %v392 = vsel %vm391, %v389, %v390
        %v394 = vadd.f32 %v383, %v392
        %s395 = sld [smem:[#allocation9 + $0x23]]
        %v396 = vstv %s395
        %v397 = vmul.f32 %v396, %v351
        %399 = vrot.lane.b32.xlu0 %v397, 48
        %v400 = vpop.permute.xlu0 %399
        %v401 = vrot.slane %v400, 1
        %vm402 = vcmask 392192
        %v403 = vsel %vm402, %v400, %v401
        %v405 = vadd.f32 %v394, %v403
        %s406 = sld [smem:[#allocation9 + $0x2a]]
        %v407 = vstv %s406
        %v408 = vmul.f32 %v407, %v351
        %410 = vrot.lane.b32.xlu0 %v408, 32
        %v411 = vpop.permute.xlu0 %410
        %v412 = vrot.slane %v411, 1
        %vm413 = vcmask 261120
        %v414 = vsel %vm413, %v411, %v412
        %v416 = vadd.f32 %v405, %v414
        %s417 = sld [smem:[#allocation9 + $0x31]]
        %v418 = vld [vmem:[%s343] ss:$2 sm:$0x3]
        %v419 = vstv %s417
        %v420 = vmul.f32 %v419, %v418
        %v421 = vadd.f32 %v416, %v420
        %s422 = sld [smem:[#allocation9 + $0x38]]
        %v423 = vld [vmem:[%s343] ss:$2 sm:$0x7]
        %v424 = vstv %s422
        %v425 = vmul.f32 %v424, %v423
        %427 = vrot.lane.b32.xlu0 %v425, 112
        %v428 = vpop.permute.xlu0 %427
        %v429 = vrot.slane %v428, 1
        %v430 = vsel %vm358, %v428, %v429
        %v432 = vadd.f32 %v421, %v430
        %s433 = sld [smem:[#allocation9 + $0x3f]]
        %v434 = vstv %s433
        %v435 = vmul.f32 %v434, %v423
        %437 = vrot.lane.b32.xlu0 %v435, 96
        %v438 = vpop.permute.xlu0 %437
        %v439 = vrot.slane %v438, 1
        %v440 = vsel %vm369, %v438, %v439
        %v442 = vadd.f32 %v432, %v440
        %s443 = sld [smem:[#allocation9 + $0x46]]
        %v444 = vstv %s443
        %v445 = vmul.f32 %v444, %v423
        %447 = vrot.lane.b32.xlu0 %v445, 80
        %v448 = vpop.permute.xlu0 %447
        %v449 = vrot.slane %v448, 1
        %v450 = vsel %vm380, %v448, %v449
        %v452 = vadd.f32 %v442, %v450
        %s453 = sld [smem:[#allocation9 + $0x4d]]
        %v454 = vstv %s453
        %v455 = vmul.f32 %v454, %v423
        %457 = vrot.lane.b32.xlu0 %v455, 64
        %v458 = vpop.permute.xlu0 %457
        %v459 = vrot.slane %v458, 1
        %v460 = vsel %vm391, %v458, %v459
        %v462 = vadd.f32 %v452, %v460
        %s463 = sld [smem:[#allocation9 + $0x54]]
        %v464 = vstv %s463
        %v465 = vmul.f32 %v464, %v423
        %467 = vrot.lane.b32.xlu0 %v465, 48
        %v468 = vpop.permute.xlu0 %467
        %v469 = vrot.slane %v468, 1
        %v470 = vsel %vm402, %v468, %v469
        %v472 = vadd.f32 %v462, %v470
        %s473 = sld [smem:[#allocation9 + $0x5b]]
        %v474 = vstv %s473
        %v475 = vmul.f32 %v474, %v423
        %477 = vrot.lane.b32.xlu0 %v475, 32
        %v478 = vpop.permute.xlu0 %477
        %v479 = vrot.slane %v478, 1
        %v480 = vsel %vm413, %v478, %v479
        %v482 = vadd.f32 %v472, %v480
        %v483 = vld [vmem:[#allocation3] ss:$8 sm:$0x3]
        %v484 = vmul.f32 %v483, %v482
        %v485 = vadd.f32 %v484, 0.0
        %s486 = sld [smem:[#allocation9 + $0x1]]
        %v487 = vstv %s486
        %v488 = vmul.f32 %v487, %v351
        %v489 = vadd.f32 %v488, 0.0
        %s490 = sld [smem:[#allocation9 + $0x8]]
        %v491 = vstv %s490
        %v492 = vmul.f32 %v491, %v351
        %494 = vrot.lane.b32.xlu0 %v492, 112
        %v495 = vpop.permute.xlu0 %494
        %v496 = vrot.slane %v495, 1
        %v497 = vsel %vm358, %v495, %v496
        %v499 = vadd.f32 %v489, %v497
        %s500 = sld [smem:[#allocation9 + $0xf]]
        %v501 = vstv %s500
        %v502 = vmul.f32 %v501, %v351
        %504 = vrot.lane.b32.xlu0 %v502, 96
        %v505 = vpop.permute.xlu0 %504
        %v506 = vrot.slane %v505, 1
        %v507 = vsel %vm369, %v505, %v506
        %v509 = vadd.f32 %v499, %v507
        %s510 = sld [smem:[#allocation9 + $0x16]]
        %v511 = vstv %s510
        %v512 = vmul.f32 %v511, %v351
        %514 = vrot.lane.b32.xlu0 %v512, 80
        %v515 = vpop.permute.xlu0 %514
        %v516 = vrot.slane %v515, 1
        %v517 = vsel %vm380, %v515, %v516
        %v519 = vadd.f32 %v509, %v517
        %s520 = sld [smem:[#allocation9 + $0x1d]]
        %v521 = vstv %s520
        %v522 = vmul.f32 %v521, %v351
        %524 = vrot.lane.b32.xlu0 %v522, 64
        %v525 = vpop.permute.xlu0 %524
        %v526 = vrot.slane %v525, 1
        %v527 = vsel %vm391, %v525, %v526
        %v529 = vadd.f32 %v519, %v527
        %s530 = sld [smem:[#allocation9 + $0x24]]
        %v531 = vstv %s530
        %v532 = vmul.f32 %v531, %v351
        %534 = vrot.lane.b32.xlu0 %v532, 48
        %v535 = vpop.permute.xlu0 %534
        %v536 = vrot.slane %v535, 1
        %v537 = vsel %vm402, %v535, %v536
        %v539 = vadd.f32 %v529, %v537
        %s540 = sld [smem:[#allocation9 + $0x2b]]
        %v541 = vstv %s540
        %v542 = vmul.f32 %v541, %v351
        %544 = vrot.lane.b32.xlu0 %v542, 32
        %v545 = vpop.permute.xlu0 %544
        %v546 = vrot.slane %v545, 1
        %v547 = vsel %vm413, %v545, %v546
        %v549 = vadd.f32 %v539, %v547
        %s550 = sld [smem:[#allocation9 + $0x32]]
        %v551 = vstv %s550
        %v552 = vmul.f32 %v551, %v423
        %v553 = vadd.f32 %v549, %v552
        %s554 = sld [smem:[#allocation9 + $0x39]]
        %v555 = vstv %s554
        %v556 = vmul.f32 %v555, %v423
        %558 = vrot.lane.b32.xlu0 %v556, 112
        %v559 = vpop.permute.xlu0 %558
        %v560 = vrot.slane %v559, 1
        %v561 = vsel %vm358, %v559, %v560
        %v563 = vadd.f32 %v553, %v561
        %s564 = sld [smem:[#allocation9 + $0x40]]
        %v565 = vstv %s564
        %v566 = vmul.f32 %v565, %v423
        %568 = vrot.lane.b32.xlu0 %v566, 96
        %v569 = vpop.permute.xlu0 %568
        %v570 = vrot.slane %v569, 1
        %v571 = vsel %vm369, %v569, %v570
        %v573 = vadd.f32 %v563, %v571
        %s574 = sld [smem:[#allocation9 + $0x47]]
        %v575 = vstv %s574
        %v576 = vmul.f32 %v575, %v423
        %578 = vrot.lane.b32.xlu0 %v576, 80
        %v579 = vpop.permute.xlu0 %578
        %v580 = vrot.slane %v579, 1
        %v581 = vsel %vm380, %v579, %v580
        %v583 = vadd.f32 %v573, %v581
        %s584 = sld [smem:[#allocation9 + $0x4e]]
        %v585 = vstv %s584
        %v586 = vmul.f32 %v585, %v423
        %588 = vrot.lane.b32.xlu0 %v586, 64
        %v589 = vpop.permute.xlu0 %588
        %v590 = vrot.slane %v589, 1
        %v591 = vsel %vm391, %v589, %v590
        %v593 = vadd.f32 %v583, %v591
        %s594 = sld [smem:[#allocation9 + $0x55]]
        %v595 = vstv %s594
        %v596 = vmul.f32 %v595, %v423
        %598 = vrot.lane.b32.xlu0 %v596, 48
        %v599 = vpop.permute.xlu0 %598
        %v600 = vrot.slane %v599, 1
        %v601 = vsel %vm402, %v599, %v600
        %v603 = vadd.f32 %v593, %v601
        %s604 = sld [smem:[#allocation9 + $0x5c]]
        %v605 = vstv %s604
        %v606 = vmul.f32 %v605, %v423
        %608 = vrot.lane.b32.xlu0 %v606, 32
        %v609 = vpop.permute.xlu0 %608
        %v610 = vrot.slane %v609, 1
        %v611 = vsel %vm413, %v609, %v610
        %v613 = vadd.f32 %v603, %v611
        %s614 = scalar_lea.vmem [#allocation3], 1
        %v615 = vld [vmem:[%s614] ss:$8 sm:$0x3]
        %617 = vrot.lane.b32.xlu0 %v613, 127
        %v618 = vpop.permute.xlu0 %617
        %v619 = vrot.slane %v618, 1
        %vm620 = vcmask 1039360
        %v621 = vsel %vm620, %v618, %v619
        %v623 = vmul.f32 %v615, %v621
        %v624 = vadd.f32 %v485, %v623
        %s625 = sld [smem:[#allocation9 + $0x2]]
        %v626 = vstv %s625
        %v627 = vmul.f32 %v626, %v351
        %v628 = vadd.f32 %v627, 0.0
        %s629 = sld [smem:[#allocation9 + $0x9]]
        %v630 = vstv %s629
        %v631 = vmul.f32 %v630, %v351
        %633 = vrot.lane.b32.xlu0 %v631, 112
        %v634 = vpop.permute.xlu0 %633
        %v635 = vrot.slane %v634, 1
        %v636 = vsel %vm358, %v634, %v635
        %v638 = vadd.f32 %v628, %v636
        %s639 = sld [smem:[#allocation9 + $0x10]]
        %v640 = vstv %s639
        %v641 = vmul.f32 %v640, %v351
        %643 = vrot.lane.b32.xlu0 %v641, 96
        %v644 = vpop.permute.xlu0 %643
        %v645 = vrot.slane %v644, 1
        %v646 = vsel %vm369, %v644, %v645
        %v648 = vadd.f32 %v638, %v646
        %s649 = sld [smem:[#allocation9 + $0x17]]
        %v650 = vstv %s649
        %v651 = vmul.f32 %v650, %v351
        %653 = vrot.lane.b32.xlu0 %v651, 80
        %v654 = vpop.permute.xlu0 %653
        %v655 = vrot.slane %v654, 1
        %v656 = vsel %vm380, %v654, %v655
        %v658 = vadd.f32 %v648, %v656
        %s659 = sld [smem:[#allocation9 + $0x1e]]
        %v660 = vstv %s659
        %v661 = vmul.f32 %v660, %v351
        %663 = vrot.lane.b32.xlu0 %v661, 64
        %v664 = vpop.permute.xlu0 %663
        %v665 = vrot.slane %v664, 1
        %v666 = vsel %vm391, %v664, %v665
        %v668 = vadd.f32 %v658, %v666
        %s669 = sld [smem:[#allocation9 + $0x25]]
        %v670 = vstv %s669
        %v671 = vmul.f32 %v670, %v351
        %673 = vrot.lane.b32.xlu0 %v671, 48
        %v674 = vpop.permute.xlu0 %673
        %v675 = vrot.slane %v674, 1
        %v676 = vsel %vm402, %v674, %v675
        %v678 = vadd.f32 %v668, %v676
        %s679 = sld [smem:[#allocation9 + $0x2c]]
        %v680 = vstv %s679
        %v681 = vmul.f32 %v680, %v351
        %683 = vrot.lane.b32.xlu0 %v681, 32
        %v684 = vpop.permute.xlu0 %683
        %v685 = vrot.slane %v684, 1
        %v686 = vsel %vm413, %v684, %v685
        %v688 = vadd.f32 %v678, %v686
        %s689 = sld [smem:[#allocation9 + $0x33]]
        %v690 = vstv %s689
        %v691 = vmul.f32 %v690, %v423
        %v692 = vadd.f32 %v688, %v691
        %s693 = sld [smem:[#allocation9 + $0x3a]]
        %v694 = vstv %s693
        %v695 = vmul.f32 %v694, %v423
        %697 = vrot.lane.b32.xlu0 %v695, 112
        %v698 = vpop.permute.xlu0 %697
        %v699 = vrot.slane %v698, 1
        %v700 = vsel %vm358, %v698, %v699
        %v702 = vadd.f32 %v692, %v700
        %s703 = sld [smem:[#allocation9 + $0x41]]
        %v704 = vstv %s703
        %v705 = vmul.f32 %v704, %v423
        %707 = vrot.lane.b32.xlu0 %v705, 96
        %v708 = vpop.permute.xlu0 %707
        %v709 = vrot.slane %v708, 1
        %v710 = vsel %vm369, %v708, %v709
        %v712 = vadd.f32 %v702, %v710
        %s713 = sld [smem:[#allocation9 + $0x48]]
        %v714 = vstv %s713
        %v715 = vmul.f32 %v714, %v423
        %717 = vrot.lane.b32.xlu0 %v715, 80
        %v718 = vpop.permute.xlu0 %717
        %v719 = vrot.slane %v718, 1
        %v720 = vsel %vm380, %v718, %v719
        %v722 = vadd.f32 %v712, %v720
        %s723 = sld [smem:[#allocation9 + $0x4f]]
        %v724 = vstv %s723
        %v725 = vmul.f32 %v724, %v423
        %727 = vrot.lane.b32.xlu0 %v725, 64
        %v728 = vpop.permute.xlu0 %727
        %v729 = vrot.slane %v728, 1
        %v730 = vsel %vm391, %v728, %v729
        %v732 = vadd.f32 %v722, %v730
        %s733 = sld [smem:[#allocation9 + $0x56]]
        %v734 = vstv %s733
        %v735 = vmul.f32 %v734, %v423
        %737 = vrot.lane.b32.xlu0 %v735, 48
        %v738 = vpop.permute.xlu0 %737
        %v739 = vrot.slane %v738, 1
        %v740 = vsel %vm402, %v738, %v739
        %v742 = vadd.f32 %v732, %v740
        %s743 = sld [smem:[#allocation9 + $0x5d]]
        %v744 = vstv %s743
        %v745 = vmul.f32 %v744, %v423
        %747 = vrot.lane.b32.xlu0 %v745, 32
        %v748 = vpop.permute.xlu0 %747
        %v749 = vrot.slane %v748, 1
        %v750 = vsel %vm413, %v748, %v749
        %v752 = vadd.f32 %v742, %v750
        %s753 = scalar_lea.vmem [#allocation3], 2
        %v754 = vld [vmem:[%s753] ss:$8 sm:$0x3]
        %756 = vrot.lane.b32.xlu0 %v752, 126
        %v757 = vpop.permute.xlu0 %756
        %v758 = vrot.slane %v757, 1
        %vm759 = vcmask 1031168
        %v760 = vsel %vm759, %v757, %v758
        %v762 = vmul.f32 %v754, %v760
        %v763 = vadd.f32 %v624, %v762
        %s764 = sld [smem:[#allocation9 + $0x3]]
        %v765 = vstv %s764
        %v766 = vmul.f32 %v765, %v351
        %v767 = vadd.f32 %v766, 0.0
        %s768 = sld [smem:[#allocation9 + $0xa]]
        %v769 = vstv %s768
        %v770 = vmul.f32 %v769, %v351
        %772 = vrot.lane.b32.xlu0 %v770, 112
        %v773 = vpop.permute.xlu0 %772
        %v774 = vrot.slane %v773, 1
        %v775 = vsel %vm358, %v773, %v774
        %v777 = vadd.f32 %v767, %v775
        %s778 = sld [smem:[#allocation9 + $0x11]]
        %v779 = vstv %s778
        %v780 = vmul.f32 %v779, %v351
        %782 = vrot.lane.b32.xlu0 %v780, 96
        %v783 = vpop.permute.xlu0 %782
        %v784 = vrot.slane %v783, 1
        %v785 = vsel %vm369, %v783, %v784
        %v787 = vadd.f32 %v777, %v785
        %s788 = sld [smem:[#allocation9 + $0x18]]
        %v789 = vstv %s788
        %v790 = vmul.f32 %v789, %v351
        %792 = vrot.lane.b32.xlu0 %v790, 80
        %v793 = vpop.permute.xlu0 %792
        %v794 = vrot.slane %v793, 1
        %v795 = vsel %vm380, %v793, %v794
        %v797 = vadd.f32 %v787, %v795
        %s798 = sld [smem:[#allocation9 + $0x1f]]
        %v799 = vstv %s798
        %v800 = vmul.f32 %v799, %v351
        %802 = vrot.lane.b32.xlu0 %v800, 64
        %v803 = vpop.permute.xlu0 %802
        %v804 = vrot.slane %v803, 1
        %v805 = vsel %vm391, %v803, %v804
        %v807 = vadd.f32 %v797, %v805
        %s808 = sld [smem:[#allocation9 + $0x26]]
        %v809 = vstv %s808
        %v810 = vmul.f32 %v809, %v351
        %812 = vrot.lane.b32.xlu0 %v810, 48
        %v813 = vpop.permute.xlu0 %812
        %v814 = vrot.slane %v813, 1
        %v815 = vsel %vm402, %v813, %v814
        %v817 = vadd.f32 %v807, %v815
        %s818 = sld [smem:[#allocation9 + $0x2d]]
        %v819 = vstv %s818
        %v820 = vmul.f32 %v819, %v351
        %822 = vrot.lane.b32.xlu0 %v820, 32
        %v823 = vpop.permute.xlu0 %822
        %v824 = vrot.slane %v823, 1
        %v825 = vsel %vm413, %v823, %v824
        %v827 = vadd.f32 %v817, %v825
        %s828 = sld [smem:[#allocation9 + $0x34]]
        %v829 = vstv %s828
        %v830 = vmul.f32 %v829, %v423
        %v831 = vadd.f32 %v827, %v830
        %s832 = sld [smem:[#allocation9 + $0x3b]]
        %v833 = vstv %s832
        %v834 = vmul.f32 %v833, %v423
        %836 = vrot.lane.b32.xlu0 %v834, 112
        %v837 = vpop.permute.xlu0 %836
        %v838 = vrot.slane %v837, 1
        %v839 = vsel %vm358, %v837, %v838
        %v841 = vadd.f32 %v831, %v839
        %s842 = sld [smem:[#allocation9 + $0x42]]
        %v843 = vstv %s842
        %v844 = vmul.f32 %v843, %v423
        %846 = vrot.lane.b32.xlu0 %v844, 96
        %v847 = vpop.permute.xlu0 %846
        %v848 = vrot.slane %v847, 1
        %v849 = vsel %vm369, %v847, %v848
        %v851 = vadd.f32 %v841, %v849
        %s852 = sld [smem:[#allocation9 + $0x49]]
        %v853 = vstv %s852
        %v854 = vmul.f32 %v853, %v423
        %856 = vrot.lane.b32.xlu0 %v854, 80
        %v857 = vpop.permute.xlu0 %856
        %v858 = vrot.slane %v857, 1
        %v859 = vsel %vm380, %v857, %v858
        %v861 = vadd.f32 %v851, %v859
        %s862 = sld [smem:[#allocation9 + $0x50]]
        %v863 = vstv %s862
        %v864 = vmul.f32 %v863, %v423
        %866 = vrot.lane.b32.xlu0 %v864, 64
        %v867 = vpop.permute.xlu0 %866
        %v868 = vrot.slane %v867, 1
        %v869 = vsel %vm391, %v867, %v868
        %v871 = vadd.f32 %v861, %v869
        %s872 = sld [smem:[#allocation9 + $0x57]]
        %v873 = vstv %s872
        %v874 = vmul.f32 %v873, %v423
        %876 = vrot.lane.b32.xlu0 %v874, 48
        %v877 = vpop.permute.xlu0 %876
        %v878 = vrot.slane %v877, 1
        %v879 = vsel %vm402, %v877, %v878
        %v881 = vadd.f32 %v871, %v879
        %s882 = sld [smem:[#allocation9 + $0x5e]]
        %v883 = vstv %s882
        %v884 = vmul.f32 %v883, %v423
        %886 = vrot.lane.b32.xlu0 %v884, 32
        %v887 = vpop.permute.xlu0 %886
        %v888 = vrot.slane %v887, 1
        %v889 = vsel %vm413, %v887, %v888
        %v891 = vadd.f32 %v881, %v889
        %s892 = scalar_lea.vmem [#allocation3], 3
        %v893 = vld [vmem:[%s892] ss:$8 sm:$0x3]
        %895 = vrot.lane.b32.xlu0 %v891, 125
        %v896 = vpop.permute.xlu0 %895
        %v897 = vrot.slane %v896, 1
        %vm898 = vcmask 1022976
        %v899 = vsel %vm898, %v896, %v897
        %v901 = vmul.f32 %v893, %v899
        %v902 = vadd.f32 %v763, %v901
        %s903 = sld [smem:[#allocation9 + $0x4]]
        %v904 = vstv %s903
        %v905 = vmul.f32 %v904, %v351
        %v906 = vadd.f32 %v905, 0.0
        %s907 = sld [smem:[#allocation9 + $0xb]]
        %v908 = vstv %s907
        %v909 = vmul.f32 %v908, %v351
        %911 = vrot.lane.b32.xlu0 %v909, 112
        %v912 = vpop.permute.xlu0 %911
        %v913 = vrot.slane %v912, 1
        %v914 = vsel %vm358, %v912, %v913
        %v916 = vadd.f32 %v906, %v914
        %s917 = sld [smem:[#allocation9 + $0x12]]
        %v918 = vstv %s917
        %v919 = vmul.f32 %v918, %v351
        %921 = vrot.lane.b32.xlu0 %v919, 96
        %v922 = vpop.permute.xlu0 %921
        %v923 = vrot.slane %v922, 1
        %v924 = vsel %vm369, %v922, %v923
        %v926 = vadd.f32 %v916, %v924
        %s927 = sld [smem:[#allocation9 + $0x19]]
        %v928 = vstv %s927
        %v929 = vmul.f32 %v928, %v351
        %931 = vrot.lane.b32.xlu0 %v929, 80
        %v932 = vpop.permute.xlu0 %931
        %v933 = vrot.slane %v932, 1
        %v934 = vsel %vm380, %v932, %v933
        %v936 = vadd.f32 %v926, %v934
        %s937 = sld [smem:[#allocation9 + $0x20]]
        %v938 = vstv %s937
        %v939 = vmul.f32 %v938, %v351
        %941 = vrot.lane.b32.xlu0 %v939, 64
        %v942 = vpop.permute.xlu0 %941
        %v943 = vrot.slane %v942, 1
        %v944 = vsel %vm391, %v942, %v943
        %v946 = vadd.f32 %v936, %v944
        %s947 = sld [smem:[#allocation9 + $0x27]]
        %v948 = vstv %s947
        %v949 = vmul.f32 %v948, %v351
        %951 = vrot.lane.b32.xlu0 %v949, 48
        %v952 = vpop.permute.xlu0 %951
        %v953 = vrot.slane %v952, 1
        %v954 = vsel %vm402, %v952, %v953
        %v956 = vadd.f32 %v946, %v954
        %s957 = sld [smem:[#allocation9 + $0x2e]]
        %v958 = vstv %s957
        %v959 = vmul.f32 %v958, %v351
        %961 = vrot.lane.b32.xlu0 %v959, 32
        %v962 = vpop.permute.xlu0 %961
        %v963 = vrot.slane %v962, 1
        %v964 = vsel %vm413, %v962, %v963
        %v966 = vadd.f32 %v956, %v964
        %s967 = sld [smem:[#allocation9 + $0x35]]
        %v968 = vstv %s967
        %v969 = vmul.f32 %v968, %v423
        %v970 = vadd.f32 %v966, %v969
        %s971 = sld [smem:[#allocation9 + $0x3c]]
        %v972 = vstv %s971
        %v973 = vmul.f32 %v972, %v423
        %975 = vrot.lane.b32.xlu0 %v973, 112
        %v976 = vpop.permute.xlu0 %975
        %v977 = vrot.slane %v976, 1
        %v978 = vsel %vm358, %v976, %v977
        %v980 = vadd.f32 %v970, %v978
        %s981 = sld [smem:[#allocation9 + $0x43]]
        %v982 = vstv %s981
        %v983 = vmul.f32 %v982, %v423
        %985 = vrot.lane.b32.xlu0 %v983, 96
        %v986 = vpop.permute.xlu0 %985
        %v987 = vrot.slane %v986, 1
        %v988 = vsel %vm369, %v986, %v987
        %v990 = vadd.f32 %v980, %v988
        %s991 = sld [smem:[#allocation9 + $0x4a]]
        %v992 = vstv %s991
        %v993 = vmul.f32 %v992, %v423
        %995 = vrot.lane.b32.xlu0 %v993, 80
        %v996 = vpop.permute.xlu0 %995
        %v997 = vrot.slane %v996, 1
        %v998 = vsel %vm380, %v996, %v997
        %v1000 = vadd.f32 %v990, %v998
        %s1001 = sld [smem:[#allocation9 + $0x51]]
        %v1002 = vstv %s1001
        %v1003 = vmul.f32 %v1002, %v423
        %1005 = vrot.lane.b32.xlu0 %v1003, 64
        %v1006 = vpop.permute.xlu0 %1005
        %v1007 = vrot.slane %v1006, 1
        %v1008 = vsel %vm391, %v1006, %v1007
        %v1010 = vadd.f32 %v1000, %v1008
        %s1011 = sld [smem:[#allocation9 + $0x58]]
        %v1012 = vstv %s1011
        %v1013 = vmul.f32 %v1012, %v423
        %1015 = vrot.lane.b32.xlu0 %v1013, 48
        %v1016 = vpop.permute.xlu0 %1015
        %v1017 = vrot.slane %v1016, 1
        %v1018 = vsel %vm402, %v1016, %v1017
        %v1020 = vadd.f32 %v1010, %v1018
        %s1021 = sld [smem:[#allocation9 + $0x5f]]
        %v1022 = vstv %s1021
        %v1023 = vmul.f32 %v1022, %v423
        %1025 = vrot.lane.b32.xlu0 %v1023, 32
        %v1026 = vpop.permute.xlu0 %1025
        %v1027 = vrot.slane %v1026, 1
        %v1028 = vsel %vm413, %v1026, %v1027
        %v1030 = vadd.f32 %v1020, %v1028
        %s1031 = scalar_lea.vmem [#allocation3], 4
        %v1032 = vld [vmem:[%s1031] ss:$8 sm:$0x3]
        %1034 = vrot.lane.b32.xlu0 %v1030, 124
        %v1035 = vpop.permute.xlu0 %1034
        %v1036 = vrot.slane %v1035, 1
        %vm1037 = vcmask 1014784
        %v1038 = vsel %vm1037, %v1035, %v1036
        %v1040 = vmul.f32 %v1032, %v1038
        %v1041 = vadd.f32 %v902, %v1040
        %s1042 = sld [smem:[#allocation9 + $0x5]]
        %v1043 = vstv %s1042
        %v1044 = vmul.f32 %v1043, %v351
        %v1045 = vadd.f32 %v1044, 0.0
        %s1046 = sld [smem:[#allocation9 + $0xc]]
        %v1047 = vstv %s1046
        %v1048 = vmul.f32 %v1047, %v351
        %1050 = vrot.lane.b32.xlu0 %v1048, 112
        %v1051 = vpop.permute.xlu0 %1050
        %v1052 = vrot.slane %v1051, 1
        %v1053 = vsel %vm358, %v1051, %v1052
        %v1055 = vadd.f32 %v1045, %v1053
        %s1056 = sld [smem:[#allocation9 + $0x13]]
        %v1057 = vstv %s1056
        %v1058 = vmul.f32 %v1057, %v351
        %1060 = vrot.lane.b32.xlu0 %v1058, 96
        %v1061 = vpop.permute.xlu0 %1060
        %v1062 = vrot.slane %v1061, 1
        %v1063 = vsel %vm369, %v1061, %v1062
        %v1065 = vadd.f32 %v1055, %v1063
        %s1066 = sld [smem:[#allocation9 + $0x1a]]
        %v1067 = vstv %s1066
        %v1068 = vmul.f32 %v1067, %v351
        %1070 = vrot.lane.b32.xlu0 %v1068, 80
        %v1071 = vpop.permute.xlu0 %1070
        %v1072 = vrot.slane %v1071, 1
        %v1073 = vsel %vm380, %v1071, %v1072
        %v1075 = vadd.f32 %v1065, %v1073
        %s1076 = sld [smem:[#allocation9 + $0x21]]
        %v1077 = vstv %s1076
        %v1078 = vmul.f32 %v1077, %v351
        %1080 = vrot.lane.b32.xlu0 %v1078, 64
        %v1081 = vpop.permute.xlu0 %1080
        %v1082 = vrot.slane %v1081, 1
        %v1083 = vsel %vm391, %v1081, %v1082
        %v1085 = vadd.f32 %v1075, %v1083
        %s1086 = sld [smem:[#allocation9 + $0x28]]
        %v1087 = vstv %s1086
        %v1088 = vmul.f32 %v1087, %v351
        %1090 = vrot.lane.b32.xlu0 %v1088, 48
        %v1091 = vpop.permute.xlu0 %1090
        %v1092 = vrot.slane %v1091, 1
        %v1093 = vsel %vm402, %v1091, %v1092
        %v1095 = vadd.f32 %v1085, %v1093
        %s1096 = sld [smem:[#allocation9 + $0x2f]]
        %v1097 = vstv %s1096
        %v1098 = vmul.f32 %v1097, %v351
        %1100 = vrot.lane.b32.xlu0 %v1098, 32
        %v1101 = vpop.permute.xlu0 %1100
        %v1102 = vrot.slane %v1101, 1
        %v1103 = vsel %vm413, %v1101, %v1102
        %v1105 = vadd.f32 %v1095, %v1103
        %s1106 = sld [smem:[#allocation9 + $0x36]]
        %v1107 = vstv %s1106
        %v1108 = vmul.f32 %v1107, %v423
        %v1109 = vadd.f32 %v1105, %v1108
        %s1110 = sld [smem:[#allocation9 + $0x3d]]
        %v1111 = vstv %s1110
        %v1112 = vmul.f32 %v1111, %v423
        %1114 = vrot.lane.b32.xlu0 %v1112, 112
        %v1115 = vpop.permute.xlu0 %1114
        %v1116 = vrot.slane %v1115, 1
        %v1117 = vsel %vm358, %v1115, %v1116
        %v1119 = vadd.f32 %v1109, %v1117
        %s1120 = sld [smem:[#allocation9 + $0x44]]
        %v1121 = vstv %s1120
        %v1122 = vmul.f32 %v1121, %v423
        %1124 = vrot.lane.b32.xlu0 %v1122, 96
        %v1125 = vpop.permute.xlu0 %1124
        %v1126 = vrot.slane %v1125, 1
        %v1127 = vsel %vm369, %v1125, %v1126
        %v1129 = vadd.f32 %v1119, %v1127
        %s1130 = sld [smem:[#allocation9 + $0x4b]]
        %v1131 = vstv %s1130
        %v1132 = vmul.f32 %v1131, %v423
        %1134 = vrot.lane.b32.xlu0 %v1132, 80
        %v1135 = vpop.permute.xlu0 %1134
        %v1136 = vrot.slane %v1135, 1
        %v1137 = vsel %vm380, %v1135, %v1136
        %v1139 = vadd.f32 %v1129, %v1137
        %s1140 = sld [smem:[#allocation9 + $0x52]]
        %v1141 = vstv %s1140
        %v1142 = vmul.f32 %v1141, %v423
        %1144 = vrot.lane.b32.xlu0 %v1142, 64
        %v1145 = vpop.permute.xlu0 %1144
        %v1146 = vrot.slane %v1145, 1
        %v1147 = vsel %vm391, %v1145, %v1146
        %v1149 = vadd.f32 %v1139, %v1147
        %s1150 = sld [smem:[#allocation9 + $0x59]]
        %v1151 = vstv %s1150
        %v1152 = vmul.f32 %v1151, %v423
        %1154 = vrot.lane.b32.xlu0 %v1152, 48
        %v1155 = vpop.permute.xlu0 %1154
        %v1156 = vrot.slane %v1155, 1
        %v1157 = vsel %vm402, %v1155, %v1156
        %v1159 = vadd.f32 %v1149, %v1157
        %s1160 = sld [smem:[#allocation9 + $0x60]]
        %v1161 = vstv %s1160
        %v1162 = vmul.f32 %v1161, %v423
        %1164 = vrot.lane.b32.xlu0 %v1162, 32
        %v1165 = vpop.permute.xlu0 %1164
        %v1166 = vrot.slane %v1165, 1
        %v1167 = vsel %vm413, %v1165, %v1166
        %v1169 = vadd.f32 %v1159, %v1167
        %s1170 = scalar_lea.vmem [#allocation3], 5
        %v1171 = vld [vmem:[%s1170] ss:$8 sm:$0x3]
        %1173 = vrot.lane.b32.xlu0 %v1169, 123
        %v1174 = vpop.permute.xlu0 %1173
        %v1175 = vrot.slane %v1174, 1
        %vm1176 = vcmask 1006592
        %v1177 = vsel %vm1176, %v1174, %v1175
        %v1179 = vmul.f32 %v1171, %v1177
        %v1180 = vadd.f32 %v1041, %v1179
        %s1181 = sld [smem:[#allocation9 + $0x6]]
        %v1182 = vstv %s1181
        %v1183 = vmul.f32 %v1182, %v351
        %v1184 = vadd.f32 %v1183, 0.0
        %s1185 = sld [smem:[#allocation9 + $0xd]]
        %v1186 = vstv %s1185
        %v1187 = vmul.f32 %v1186, %v351
        %1189 = vrot.lane.b32.xlu0 %v1187, 112
        %v1190 = vpop.permute.xlu0 %1189
        %v1191 = vrot.slane %v1190, 1
        %v1192 = vsel %vm358, %v1190, %v1191
        %v1194 = vadd.f32 %v1184, %v1192
        %s1195 = sld [smem:[#allocation9 + $0x14]]
        %v1196 = vstv %s1195
        %v1197 = vmul.f32 %v1196, %v351
        %1199 = vrot.lane.b32.xlu0 %v1197, 96
        %v1200 = vpop.permute.xlu0 %1199
        %v1201 = vrot.slane %v1200, 1
        %v1202 = vsel %vm369, %v1200, %v1201
        %v1204 = vadd.f32 %v1194, %v1202
        %s1205 = sld [smem:[#allocation9 + $0x1b]]
        %v1206 = vstv %s1205
        %v1207 = vmul.f32 %v1206, %v351
        %1209 = vrot.lane.b32.xlu0 %v1207, 80
        %v1210 = vpop.permute.xlu0 %1209
        %v1211 = vrot.slane %v1210, 1
        %v1212 = vsel %vm380, %v1210, %v1211
        %v1214 = vadd.f32 %v1204, %v1212
        %s1215 = sld [smem:[#allocation9 + $0x22]]
        %v1216 = vstv %s1215
        %v1217 = vmul.f32 %v1216, %v351
        %1219 = vrot.lane.b32.xlu0 %v1217, 64
        %v1220 = vpop.permute.xlu0 %1219
        %v1221 = vrot.slane %v1220, 1
        %v1222 = vsel %vm391, %v1220, %v1221
        %v1224 = vadd.f32 %v1214, %v1222
        %s1225 = sld [smem:[#allocation9 + $0x29]]
        %v1226 = vstv %s1225
        %v1227 = vmul.f32 %v1226, %v351
        %1229 = vrot.lane.b32.xlu0 %v1227, 48
        %v1230 = vpop.permute.xlu0 %1229
        %v1231 = vrot.slane %v1230, 1
        %v1232 = vsel %vm402, %v1230, %v1231
        %v1234 = vadd.f32 %v1224, %v1232
        %s1235 = sld [smem:[#allocation9 + $0x30]]
        %v1236 = vstv %s1235
        %v1237 = vmul.f32 %v1236, %v351
        %1239 = vrot.lane.b32.xlu0 %v1237, 32
        %v1240 = vpop.permute.xlu0 %1239
        %v1241 = vrot.slane %v1240, 1
        %v1242 = vsel %vm413, %v1240, %v1241
        %v1244 = vadd.f32 %v1234, %v1242
        %s1245 = sld [smem:[#allocation9 + $0x37]]
        %v1246 = vstv %s1245
        %v1247 = vmul.f32 %v1246, %v423
        %v1248 = vadd.f32 %v1244, %v1247
        %s1249 = sld [smem:[#allocation9 + $0x3e]]
        %v1250 = vstv %s1249
        %v1251 = vmul.f32 %v1250, %v423
        %1253 = vrot.lane.b32.xlu0 %v1251, 112
        %v1254 = vpop.permute.xlu0 %1253
        %v1255 = vrot.slane %v1254, 1
        %v1256 = vsel %vm358, %v1254, %v1255
        %v1258 = vadd.f32 %v1248, %v1256
        %s1259 = sld [smem:[#allocation9 + $0x45]]
        %v1260 = vstv %s1259
        %v1261 = vmul.f32 %v1260, %v423
        %1263 = vrot.lane.b32.xlu0 %v1261, 96
        %v1264 = vpop.permute.xlu0 %1263
        %v1265 = vrot.slane %v1264, 1
        %v1266 = vsel %vm369, %v1264, %v1265
        %v1268 = vadd.f32 %v1258, %v1266
        %s1269 = sld [smem:[#allocation9 + $0x4c]]
        %v1270 = vstv %s1269
        %v1271 = vmul.f32 %v1270, %v423
        %1273 = vrot.lane.b32.xlu0 %v1271, 80
        %v1274 = vpop.permute.xlu0 %1273
        %v1275 = vrot.slane %v1274, 1
        %v1276 = vsel %vm380, %v1274, %v1275
        %v1278 = vadd.f32 %v1268, %v1276
        %s1279 = sld [smem:[#allocation9 + $0x53]]
        %v1280 = vstv %s1279
        %v1281 = vmul.f32 %v1280, %v423
        %1283 = vrot.lane.b32.xlu0 %v1281, 64
        %v1284 = vpop.permute.xlu0 %1283
        %v1285 = vrot.slane %v1284, 1
        %v1286 = vsel %vm391, %v1284, %v1285
        %v1288 = vadd.f32 %v1278, %v1286
        %s1289 = sld [smem:[#allocation9 + $0x5a]]
        %v1290 = vstv %s1289
        %v1291 = vmul.f32 %v1290, %v423
        %1293 = vrot.lane.b32.xlu0 %v1291, 48
        %v1294 = vpop.permute.xlu0 %1293
        %v1295 = vrot.slane %v1294, 1
        %v1296 = vsel %vm402, %v1294, %v1295
        %v1298 = vadd.f32 %v1288, %v1296
        %s1299 = sld [smem:[#allocation9 + $0x61]]
        %v1300 = vstv %s1299
        %v1301 = vmul.f32 %v1300, %v423
        %1303 = vrot.lane.b32.xlu0 %v1301, 32
        %v1304 = vpop.permute.xlu0 %1303
        %v1305 = vrot.slane %v1304, 1
        %v1306 = vsel %vm413, %v1304, %v1305
        %v1308 = vadd.f32 %v1298, %v1306
        %s1309 = scalar_lea.vmem [#allocation3], 6
        %v1310 = vld [vmem:[%s1309] ss:$8 sm:$0x3]
        %1312 = vrot.lane.b32.xlu0 %v1308, 122
        %v1313 = vpop.permute.xlu0 %1312
        %v1314 = vrot.slane %v1313, 1
        %vm1315 = vcmask 998400
        %v1316 = vsel %vm1315, %v1313, %v1314
        %v1318 = vmul.f32 %v1310, %v1316
        %v1319 = vadd.f32 %v1180, %v1318
        %s1320 = sld [smem:[#allocation10]]
        %v1321 = vstv %s1320
        %v1322 = vmul.f32 %v1319, %v1321
        %s1323 = sld [smem:[#allocation10 + $0x1]]
        %v1324 = vstv %s1323
        %v1325 = vadd.f32 %v1322, %v1324
        %v1326 = vxor.u32 %v1325, 2147483648
        %v1327 = vmul.f32 %v1326, 1.442695
        %v1328 = vpow.pop %v1327
        %v1329 = vadd.f32 %v1328, 1.0
        %v1330 = vrcp.pop %v1329
        %v1331 = vmul.f32 1.0, %v1330
        %v1332 = vld [vmem:[%s220] sm:$0xff]
        %v1334 = vlaneseq
        %v1335 = vshrl.u32 %v1334, 7
        %v1336 = vsub.s32 0, %v1335
        %v1337 = vrot.slane %v1331, %v1336
        %v1338 = vlaneseq
        %v1339 = vshrl.u32 %v1338, 7
        %v1340 = vsub.s32 1, %v1339
        %v1341 = vrot.slane %v1331, %v1340
        %v1342 = vcombine.low %v1337, %v1341
        %v1344 = vmul.f32 %v1332, %v1342
        %1345 = vst [vmem:[%s253] sm:$0xff] %v1344
        %s1346 = sand.u32 %s121, 1
        %s1347 = scalar_lea.sflag [#allocation5], %s1346
        %s1348 = sand.u32 %s121, 1
        %s1349 = smul.addr %s1348, 8
        %s1350 = scalar_lea.vmem [#allocation12], %s1349
        // Predicated region
        $region53: #{tpu_custom_call.1} parent=35 // pred_check
          %p1351 = pneg %p131
        $region54: #{tpu_custom_call.1} parent=35 // pred_check_branch
          %1353 = sbr.rel (%p1351) target = $region56
        $region55: #{tpu_custom_call.1} parent=35 // pred_region
          %s1355 = ssub.s32 128, 128
          %1356 = vsyncadd %s1347, %s1355
          %s1357 = smul.addr %s24, 2
          %s1358 = smul.addr %s1357, 64
          %s1359 = scalar_lea.hbm %s4, %s1358
          %s1361 = sshll.u32 %s1350, 4
          %s1362 = int_to_ptr.vmem [resolvable:$true] %s1361
          %1364 = dma.vmem_to_hbm [thread:$0]  %s1362, 128, %s1359, %s1347
        $region56: #{tpu_custom_call.1} parent=35 // pred_fallthru
          _
      $region36: #{tpu_custom_call.1} parent=5 // pred_fallthru
        _
      %p1365 = scmp.le.s32.totalorder 2, %s19
      // Predicated region
      $region57: #{tpu_custom_call.1} parent=5 // pred_check
        %p1366 = pneg %p1365
      $region58: #{tpu_custom_call.1} parent=5 // pred_check_branch
        %1368 = sbr.rel (%p1366) target = $region60
      $region59: #{tpu_custom_call.1} parent=5 // pred_region
        %s1369 = ssub.s32 %s19, 2
        // Predicated region
        $region61: #{tpu_custom_call.1} parent=59 // pred_check
          %p1370 = pneg %p137
        $region62: #{tpu_custom_call.1} parent=59 // pred_check_branch
          %1372 = sbr.rel (%p1370) target = $region64
        $region63: #{tpu_custom_call.1} parent=59 // pred_region
          %s1373 = sand.u32 %s122, 1
          %s1374 = scalar_lea.sflag [#allocation5], %s1373
          %s1375 = sand.u32 %s122, 1
          %s1376 = smul.addr %s1375, 8
          %s1377 = scalar_lea.vmem [#allocation12], %s1376
          %1378 = dma.done %s1374, 128
        $region64: #{tpu_custom_call.1} parent=59 // pred_fallthru
          _
      $region60: #{tpu_custom_call.1} parent=5 // pred_fallthru
        _
    $region6: #{tpu_custom_call.1} parent=1 // loop_footer
      %s23 = sadd.s32 1, %s19
    $region7: #{tpu_custom_call.1} parent=1 // loop_footer_branch
      %18 = sbr.rel target = $region3
    $region8: #{tpu_custom_call.1} parent=1 // loop_exit
      _
    %1379 = vsyncpa [#allocation4], 1
    %s1380 = scalar_lea.sflag [#allocation4], 1
    %1381 = vsyncpa %s1380, 1
    %1382 = vsyncpa [#allocation8], 1
    %s1383 = scalar_lea.sflag [#allocation8], 1
    %1384 = vsyncpa %s1383, 1
    %1385 = vsyncpa [#allocation5], 1
    %s1386 = scalar_lea.sflag [#allocation5], 1
    %1387 = vsyncpa %s1386, 1
    %1388 = vsyncpa [#allocation6], 1
    %s1389 = scalar_lea.sflag [#allocation6], 1
    %1390 = vsyncpa %s1389, 1
    %1391 = vsyncpa [#allocation11], 1

</llo_original>
